<compile_context>
chip_gen: v7x
topology: tpu7x:2x2x1
jax: 0.10.0
libtpu: 0.0.40
codegen_flags: <defaults>
</compile_context>

<pallas_src>
import jax
import jax.numpy as jnp
from jax.experimental import pallas as pl
from jax.experimental.pallas import tpu as pltpu

_VMEM_LIMIT = 32 * 1024 * 1024  # per-step footprint is < 1 MiB; 32 MiB is safe on all gens


def _activation(y, kind):
    """'RE' -> ReLU, anything else ('HS') -> h_swish = x * relu6(x + 3) / 6."""
    if kind == "RE":
        return jnp.maximum(y, 0.0)
    return y * (jnp.clip(y + 3.0, 0.0, 6.0) * (1.0 / 6.0))


# ---------------------------------------------------------------------------
# Fused kernel: expand + depthwise + [SE] + point + [residual], per batch tile.
# ---------------------------------------------------------------------------
def _make_fused_kernel(*, ksize, stride, pad, H, W, OH, OW, nonlinear, use_se,
                       use_connect, block_b):
    def kernel(*refs):
        i = 0
        x_ref = refs[i]; i += 1          # (Bt, Cin, HW)   NCHW, spatial flattened
        w_exp_ref = refs[i]; i += 1      # (Cin, Cexp)     BN1 scale folded in
        t1_ref = refs[i]; i += 1         # (1, Cexp)
        w_dw_ref = refs[i]; i += 1       # (K*K, Cexp)     BN2 scale folded in
        t2_ref = refs[i]; i += 1         # (1, Cexp)
        if use_se:
            w1_ref, b1_ref, w2_ref, b2_ref = refs[i:i + 4]; i += 4
        wpt_ref = refs[i]; i += 1        # (Cout, Cexp)    BN3 scale folded in
        t3_ref = refs[i]; i += 1         # (Cout, 1)
        o_ref = refs[i]; i += 1          # (Bt, Cout, OHW)
        pad_ref = refs[i]                # VMEM scratch (Hp, Wp, Cexp)

        C = w_exp_ref.shape[1]

        # Zero the padded scratch once per grid step (border stays zero; the interior
        # is fully overwritten for every image). Done unconditionally so it is safe
        # under "parallel" grid sharding across cores.
        if pad > 0:
            pad_ref[...] = jnp.zeros_like(pad_ref)

        for b in range(block_b):                         # static unroll over the batch tile
            x_b = x_ref[b].astype(jnp.float32)           # (Cin, HW)

            # ---- 1x1 expand conv + shift + activation ---------------------
            # y1[hw, ce] = sum_ci x_b[ci, hw] * w_exp[ci, ce]   (trans-A MXU matmul)
            y1 = jax.lax.dot_general(
                x_b, w_exp_ref[...],
                dimension_numbers=(((0,), (0,)), ((), ())),
                preferred_element_type=jnp.float32)      # (HW, Cexp)
            y1 = _activation(y1 + t1_ref[...], nonlinear)

            # ---- KxK depthwise conv (+ shift), padding done in VMEM -------
            pad_ref[pl.ds(pad, H), pl.ds(pad, W), :] = y1.reshape(H, W, C)

            acc = jnp.zeros((OH, OW, C), jnp.float32)
            if stride == 1:
                for kh in range(ksize):
                    for kw in range(ksize):
                        win = pad_ref[pl.ds(kh, OH), pl.ds(kw, OW), :]
                        acc = acc + win * w_dw_ref[kh * ksize + kw, :]
            else:
                xp = pad_ref[...]                        # (Hp, Wp, C)
                for kh in range(ksize):
                    for kw in range(ksize):
                        win = jax.lax.slice(
                            xp,
                            (kh, kw, 0),
                            (kh + stride * (OH - 1) + 1,
                             kw + stride * (OW - 1) + 1, C),
                            (stride, stride, 1))
                        acc = acc + win * w_dw_ref[kh * ksize + kw, :]
            y2 = (acc + t2_ref[...]).reshape(OH * OW, C)  # (OHW, Cexp)

            # ---- SqueezeBlock SE gate -------------------------------------
            if use_se:
                pooled = jnp.mean(y2, axis=0, keepdims=True)              # (1, Cexp)
                h = jnp.dot(pooled, w1_ref[...],
                            preferred_element_type=jnp.float32) + b1_ref[...]
                h = jnp.maximum(h, 0.0)
                g = jnp.dot(h, w2_ref[...],
                            preferred_element_type=jnp.float32) + b2_ref[...]
                g = jnp.clip(g + 3.0, 0.0, 6.0) * (1.0 / 6.0)             # (1, Cexp)
                y2 = y2 * g

            # ---- 1x1 point conv, produced lane-dense as (Cout, OHW) -------
            # z[co, ohw] = sum_ce wpt[co, ce] * y2[ohw, ce]
            z = jax.lax.dot_general(
                wpt_ref[...], y2,
                dimension_numbers=(((1,), (1,)), ((), ())),
                preferred_element_type=jnp.float32)      # (Cout, OHW)
            z = _activation(z + t3_ref[...], nonlinear)
            if use_connect:
                z = z + x_b                              # NCHW residual, same layout
            o_ref[b] = z.astype(o_ref.dtype)

    return kernel


def _pick_block_b(B, max_bt=8):
    """Largest divisor of B <= max_bt that keeps >= 2 grid steps (megacore / v7x)."""
    best = 1
    for bt in range(1, min(B, max_bt) + 1):
        if B % bt != 0:
            continue
        if B // bt >= 2 or B == 1:
            best = bt
    return best


# ---------------------------------------------------------------------------
# Wrapper
# ---------------------------------------------------------------------------
def mobile_block(x, params, *, kernel_size, stride, nonlinear, se, exp_size,
                 out_channels, block_b=None):
    """x: (B, Cin, H, W) float32 NCHW (PyTorch convention). Returns (B, Cout, OH, OW)."""
    B, Cin, H, W = x.shape
    pad = (kernel_size - 1) // 2
    OH = (H + 2 * pad - kernel_size) // stride + 1
    OW = (W + 2 * pad - kernel_size) // stride + 1
    use_connect = (stride == 1) and (Cin == out_channels)
    HW, OHW = H * W, OH * OW
    Hp, Wp = H + 2 * pad, W + 2 * pad

    if block_b is None:
        block_b = _pick_block_b(B)
    assert B % block_b == 0, "batch must be divisible by the batch tile"

    # Fold BN scales into the conv weights outside the kernel; only shift adds remain.
    w_exp_s = params["w_exp"] * params["bn1_scale"][None, :]                 # (Cin, Cexp)
    w_dw_s = params["w_dw"] * params["bn2_scale"][None, :]                   # (K*K, Cexp)
    w_pt_t_s = (params["w_pt"] * params["bn3_scale"][None, :]).T             # (Cout, Cexp)

    # NCHW with spatial flattened -- a pure reshape (no transpose, no HBM copy);
    # last dim HW is lane-dense for input loads and matches the residual layout.
    x_flat = x.reshape(B, Cin, HW)

    const = lambda i: (0, 0)   # weights / shifts stay VMEM-resident across grid steps

    inputs = [
        x_flat,
        w_exp_s,
        params["bn1_shift"].reshape(1, exp_size),
        w_dw_s,
        params["bn2_shift"].reshape(1, exp_size),
    ]
    in_specs = [
        pl.BlockSpec((block_b, Cin, HW), lambda i: (i, 0, 0)),
        pl.BlockSpec((Cin, exp_size), const),
        pl.BlockSpec((1, exp_size), const),
        pl.BlockSpec((kernel_size * kernel_size, exp_size), const),
        pl.BlockSpec((1, exp_size), const),
    ]
    if se:
        Chid = params["w_se1"].shape[1]
        inputs += [
            params["w_se1"],
            params["b_se1"].reshape(1, Chid),
            params["w_se2"],
            params["b_se2"].reshape(1, exp_size),
        ]
        in_specs += [
            pl.BlockSpec((exp_size, Chid), const),
            pl.BlockSpec((1, Chid), const),
            pl.BlockSpec((Chid, exp_size), const),
            pl.BlockSpec((1, exp_size), const),
        ]
    inputs += [w_pt_t_s, params["bn3_shift"].reshape(out_channels, 1)]
    in_specs += [
        pl.BlockSpec((out_channels, exp_size), const),
        pl.BlockSpec((out_channels, 1), const),
    ]

    kernel = _make_fused_kernel(
        ksize=kernel_size, stride=stride, pad=pad, H=H, W=W, OH=OH, OW=OW,
        nonlinear=nonlinear, use_se=se, use_connect=use_connect, block_b=block_b)

    out_flat = pl.pallas_call(
        kernel,
        out_shape=jax.ShapeDtypeStruct((B, out_channels, OHW), x.dtype),
        grid=(B // block_b,),
        in_specs=in_specs,
        out_specs=pl.BlockSpec((block_b, out_channels, OHW), lambda i: (i, 0, 0)),
        scratch_shapes=[pltpu.VMEM((Hp, Wp, exp_size), jnp.float32)],
        compiler_params=pltpu.CompilerParams(
            dimension_semantics=("parallel",),       # batch tiles are independent
            vmem_limit_bytes=_VMEM_LIMIT),
    )(*inputs)

    # Output already in NCHW orientation -> pure reshape, no transpose.
    return out_flat.reshape(B, out_channels, OH, OW)


# ---------------------------------------------------------------------------
# Synthetic params (PyTorch shapes pre-transposed / BN folded) + pure-JAX reference
# ---------------------------------------------------------------------------
def _fold_bn(gamma, beta, mean, var, conv_bias=None, eps=1e-5):
    scale = gamma * jax.lax.rsqrt(var + eps)
    bias = 0.0 if conv_bias is None else conv_bias
    shift = (bias - mean) * scale + beta
    return scale, shift


def make_params(key, cin, cout, exp, ksize, divide=4):
    ks = jax.random.split(key, 21)
    n = lambda k, shape, s=0.1: s * jax.random.normal(k, shape, jnp.float32)

    # expand 1x1 conv (bias=False); PyTorch stores (Cexp, Cin, 1, 1); here (Cin, Cexp).
    w_exp = n(ks[0], (cin, exp))
    s1, t1 = _fold_bn(1.0 + n(ks[1], (exp,)), n(ks[2], (exp,)),
                      n(ks[3], (exp,)), 1.0 + jnp.abs(n(ks[4], (exp,))))

    # depthwise conv (Cexp, 1, K, K) + bias; stored taps-major (K*K, Cexp), row = kh*K + kw.
    w_dw = n(ks[5], (ksize * ksize, exp))
    s2, t2 = _fold_bn(1.0 + n(ks[6], (exp,)), n(ks[7], (exp,)),
                      n(ks[8], (exp,)), 1.0 + jnp.abs(n(ks[9], (exp,))),
                      conv_bias=n(ks[10], (exp,)))

    # SE MLP; PyTorch Linear stores (out, in); here pre-transposed (in, out).
    hid = exp // divide
    w_se1, b_se1 = n(ks[11], (exp, hid)), n(ks[12], (hid,))
    w_se2, b_se2 = n(ks[13], (hid, exp)), n(ks[14], (exp,))

    # point 1x1 conv (Cout, Cexp, 1, 1) + bias; here (Cexp, Cout).
    w_pt = n(ks[15], (exp, cout))
    s3, t3 = _fold_bn(1.0 + n(ks[16], (cout,)), n(ks[17], (cout,)),
                      n(ks[18], (cout,)), 1.0 + jnp.abs(n(ks[19], (cout,))),
                      conv_bias=n(ks[20], (cout,)))

    return dict(w_exp=w_exp, bn1_scale=s1, bn1_shift=t1,
                w_dw=w_dw, bn2_scale=s2, bn2_shift=t2,
                w_se1=w_se1, b_se1=b_se1, w_se2=w_se2, b_se2=b_se2,
                w_pt=w_pt, bn3_scale=s3, bn3_shift=t3)


def reference_mobile_block(x, p, *, kernel_size, stride, nonlinear, se, out_channels):
    """Pure-JAX reference in NCHW (independent depthwise via lax.conv)."""
    B, Cin, H, W = x.shape
    pad = (kernel_size - 1) // 2
    use_connect = (stride == 1) and (Cin == out_channels)

    def bn(y, scale, shift):
        return y * scale[None, :, None, None] + shift[None, :, None, None]

    y = jnp.einsum("bchw,ce->behw", x, p["w_exp"])
    y = _activation(bn(y, p["bn1_scale"], p["bn1_shift"]), nonlinear)

    exp = p["w_exp"].shape[1]
    w_oihw = p["w_dw"].T.reshape(exp, 1, kernel_size, kernel_size)
    y = jax.lax.conv_general_dilated(
        y, w_oihw, window_strides=(stride, stride),
        padding=[(pad, pad), (pad, pad)],
        feature_group_count=exp,
        dimension_numbers=("NCHW", "OIHW", "NCHW"))
    y = bn(y, p["bn2_scale"], p["bn2_shift"])

    if se:
        pooled = jnp.mean(y, axis=(2, 3))                                   # (B, Cexp)
        h = jnp.maximum(pooled @ p["w_se1"] + p["b_se1"], 0.0)
        g = jnp.clip(h @ p["w_se2"] + p["b_se2"] + 3.0, 0.0, 6.0) / 6.0
        y = y * g[:, :, None, None]

    z = jnp.einsum("behw,eo->bohw", y, p["w_pt"])
    z = _activation(bn(z, p["bn3_scale"], p["bn3_shift"]), nonlinear)
    if use_connect:
        z = z + x
    return z


if __name__ == "__main__":
    # Small MobileBlock config exercising SE + h_swish + residual (stride 1, Cin == Cout).
    B, Cin, H, W = 2, 16, 16, 16
    Cout, exp_size, K, stride = 16, 128, 3, 1
    nonlinear, se = "HS", True

    key = jax.random.PRNGKey(0)
    kx, kp = jax.random.split(key)
    x = jax.random.normal(kx, (B, Cin, H, W), dtype=jnp.float32)
    params = make_params(kp, Cin, Cout, exp_size, K)

    out = mobile_block(x, params, kernel_size=K, stride=stride, nonlinear=nonlinear,
                       se=se, exp_size=exp_size, out_channels=Cout)
    out = jax.block_until_ready(out)

    ref = reference_mobile_block(x, params, kernel_size=K, stride=stride,
                                 nonlinear=nonlinear, se=se, out_channels=Cout)
    assert out.shape == (B, Cout, H, W)
    # Tolerance accounts for default (fast) MXU precision of the f32 matmuls on both sides.
    assert jnp.allclose(out, ref, atol=2e-2, rtol=2e-2), "mismatch vs reference"

    print("KERNEL_OK")
</pallas_src>

<mosaic_0001>
module attributes {stable_mosaic.version = 11 : i64} {
  func.func @kernel(%arg0: i32, %arg1: memref<1x16x256xf32, #tpu.memory_space<vmem>>, %arg2: memref<16x128xf32, #tpu.memory_space<vmem>>, %arg3: memref<1x128xf32, #tpu.memory_space<vmem>>, %arg4: memref<9x128xf32, #tpu.memory_space<vmem>>, %arg5: memref<1x128xf32, #tpu.memory_space<vmem>>, %arg6: memref<128x32xf32, #tpu.memory_space<vmem>>, %arg7: memref<1x32xf32, #tpu.memory_space<vmem>>, %arg8: memref<32x128xf32, #tpu.memory_space<vmem>>, %arg9: memref<1x128xf32, #tpu.memory_space<vmem>>, %arg10: memref<16x128xf32, #tpu.memory_space<vmem>>, %arg11: memref<16x1xf32, #tpu.memory_space<vmem>>, %arg12: memref<1x16x256xf32, #tpu.memory_space<vmem>>, %arg13: memref<18x18x128xf32, #tpu.memory_space<vmem>>) attributes {dimension_semantics = [#tpu.dimension_semantics<parallel>], iteration_bounds = array<i64: 2>, scalar_prefetch = 0 : i64, scratch_operands = 1 : i64, tpu.core_type = #tpu.core_type<tc>, window_params = [{transform_indices = @transform_0, window_bounds = array<i64: 1, 16, 256>}, {pipeline_mode = #tpu.pipeline_mode<synchronous>, transform_indices = @transform_1, window_bounds = array<i64: 16, 128>}, {pipeline_mode = #tpu.pipeline_mode<synchronous>, transform_indices = @transform_2, window_bounds = array<i64: 1, 128>}, {pipeline_mode = #tpu.pipeline_mode<synchronous>, transform_indices = @transform_3, window_bounds = array<i64: 9, 128>}, {pipeline_mode = #tpu.pipeline_mode<synchronous>, transform_indices = @transform_4, window_bounds = array<i64: 1, 128>}, {pipeline_mode = #tpu.pipeline_mode<synchronous>, transform_indices = @transform_5, window_bounds = array<i64: 128, 32>}, {pipeline_mode = #tpu.pipeline_mode<synchronous>, transform_indices = @transform_6, window_bounds = array<i64: 1, 32>}, {pipeline_mode = #tpu.pipeline_mode<synchronous>, transform_indices = @transform_7, window_bounds = array<i64: 32, 128>}, {pipeline_mode = #tpu.pipeline_mode<synchronous>, transform_indices = @transform_8, window_bounds = array<i64: 1, 128>}, {pipeline_mode = #tpu.pipeline_mode<synchronous>, transform_indices = @transform_9, window_bounds = array<i64: 16, 128>}, {pipeline_mode = #tpu.pipeline_mode<synchronous>, transform_indices = @transform_10, window_bounds = array<i64: 16, 1>}, {transform_indices = @transform_11, window_bounds = array<i64: 1, 16, 256>}]} {
    %cst = arith.constant 0.000000e+00 : f32
    %0 = vector.broadcast %cst : f32 to vector<18x18x128xf32>
    %c0 = arith.constant 0 : index
    %c0_0 = arith.constant 0 : index
    %c0_1 = arith.constant 0 : index
    %1 = vector.load %arg13[%c0, %c0_0, %c0_1] : memref<18x18x128xf32, #tpu.memory_space<vmem>>, vector<18x18x128xf32>
    tpu.vector_store %arg13[%c0, %c0_0, %c0_1], %0 {strides = array<i32>} : memref<18x18x128xf32, #tpu.memory_space<vmem>>, vector<18x18x128xf32>,
    %c0_2 = arith.constant 0 : index
    %c0_3 = arith.constant 0 : index
    %c0_4 = arith.constant 0 : index
    %2 = vector.load %arg1[%c0_2, %c0_3, %c0_4] : memref<1x16x256xf32, #tpu.memory_space<vmem>>, vector<1x16x256xf32>
    %3 = vector.shape_cast %2 : vector<1x16x256xf32> to vector<16x256xf32>
    %c0_5 = arith.constant 0 : index
    %c0_6 = arith.constant 0 : index
    %4 = vector.load %arg2[%c0_5, %c0_6] : memref<16x128xf32, #tpu.memory_space<vmem>>, vector<16x128xf32>
    %cst_7 = arith.constant dense<0.000000e+00> : vector<256x128xf32>
    %5 = tpu.matmul %3, %4, %cst_7 {dimension_numbers = #tpu.dot_dimension_numbers<[0], [0], [1], [1], [0, 1, 1, 1], [], []>} : vector<16x256xf32>, vector<16x128xf32>, vector<256x128xf32> -> vector<256x128xf32>
    %c0_8 = arith.constant 0 : index
    %c0_9 = arith.constant 0 : index
    %6 = vector.load %arg3[%c0_8, %c0_9] : memref<1x128xf32, #tpu.memory_space<vmem>>, vector<1x128xf32>
    %7 = vector.broadcast %6 : vector<1x128xf32> to vector<256x128xf32>
    %8 = arith.addf %5, %7 : vector<256x128xf32>
    %cst_10 = arith.constant 3.000000e+00 : f32
    %9 = vector.broadcast %cst_10 : f32 to vector<256x128xf32>
    %10 = arith.addf %8, %9 : vector<256x128xf32>
    %cst_11 = arith.constant 0.000000e+00 : f32
    %cst_12 = arith.constant 6.000000e+00 : f32
    %11 = vector.broadcast %cst_11 : f32 to vector<256x128xf32>
    %12 = arith.maximumf %11, %10 : vector<256x128xf32>
    %13 = vector.broadcast %cst_12 : f32 to vector<256x128xf32>
    %14 = arith.minimumf %13, %12 : vector<256x128xf32>
    %cst_13 = arith.constant 0.166666672 : f32
    %15 = vector.broadcast %cst_13 : f32 to vector<256x128xf32>
    %16 = arith.mulf %14, %15 : vector<256x128xf32>
    %17 = arith.mulf %8, %16 : vector<256x128xf32>
    %18 = vector.shape_cast %17 : vector<256x128xf32> to vector<16x16x128xf32>
    %c1 = arith.constant 1 : index
    %c1_14 = arith.constant 1 : index
    %c0_15 = arith.constant 0 : index
    %19 = vector.load %arg13[%c1, %c1_14, %c0_15] : memref<18x18x128xf32, #tpu.memory_space<vmem>>, vector<16x16x128xf32>
    tpu.vector_store %arg13[%c1, %c1_14, %c0_15], %18 {strides = array<i32>} : memref<18x18x128xf32, #tpu.memory_space<vmem>>, vector<16x16x128xf32>,
    %cst_16 = arith.constant 0.000000e+00 : f32
    %20 = vector.broadcast %cst_16 : f32 to vector<16x16x128xf32>
    %c0_17 = arith.constant 0 : index
    %c0_18 = arith.constant 0 : index
    %c0_19 = arith.constant 0 : index
    %21 = vector.load %arg13[%c0_17, %c0_18, %c0_19] : memref<18x18x128xf32, #tpu.memory_space<vmem>>, vector<16x16x128xf32>
    %c0_20 = arith.constant 0 : index
    %c0_21 = arith.constant 0 : index
    %22 = vector.load %arg4[%c0_20, %c0_21] : memref<9x128xf32, #tpu.memory_space<vmem>>, vector<1x128xf32>
    %23 = vector.shape_cast %22 : vector<1x128xf32> to vector<128xf32>
    %24 = vector.shape_cast %23 : vector<128xf32> to vector<1x1x128xf32>
    %25 = vector.broadcast %24 : vector<1x1x128xf32> to vector<16x16x128xf32>
    %26 = arith.mulf %21, %25 : vector<16x16x128xf32>
    %27 = arith.addf %20, %26 : vector<16x16x128xf32>
    %c0_22 = arith.constant 0 : index
    %c1_23 = arith.constant 1 : index
    %c0_24 = arith.constant 0 : index
    %28 = vector.load %arg13[%c0_22, %c1_23, %c0_24] : memref<18x18x128xf32, #tpu.memory_space<vmem>>, vector<16x16x128xf32>
    %c1_25 = arith.constant 1 : index
    %c0_26 = arith.constant 0 : index
    %29 = vector.load %arg4[%c1_25, %c0_26] : memref<9x128xf32, #tpu.memory_space<vmem>>, vector<1x128xf32>
    %30 = vector.shape_cast %29 : vector<1x128xf32> to vector<128xf32>
    %31 = vector.shape_cast %30 : vector<128xf32> to vector<1x1x128xf32>
    %32 = vector.broadcast %31 : vector<1x1x128xf32> to vector<16x16x128xf32>
    %33 = arith.mulf %28, %32 : vector<16x16x128xf32>
    %34 = arith.addf %27, %33 : vector<16x16x128xf32>
    %c0_27 = arith.constant 0 : index
    %c2 = arith.constant 2 : index
    %c0_28 = arith.constant 0 : index
    %35 = vector.load %arg13[%c0_27, %c2, %c0_28] : memref<18x18x128xf32, #tpu.memory_space<vmem>>, vector<16x16x128xf32>
    %c2_29 = arith.constant 2 : index
    %c0_30 = arith.constant 0 : index
    %36 = vector.load %arg4[%c2_29, %c0_30] : memref<9x128xf32, #tpu.memory_space<vmem>>, vector<1x128xf32>
    %37 = vector.shape_cast %36 : vector<1x128xf32> to vector<128xf32>
    %38 = vector.shape_cast %37 : vector<128xf32> to vector<1x1x128xf32>
    %39 = vector.broadcast %38 : vector<1x1x128xf32> to vector<16x16x128xf32>
    %40 = arith.mulf %35, %39 : vector<16x16x128xf32>
    %41 = arith.addf %34, %40 : vector<16x16x128xf32>
    %c1_31 = arith.constant 1 : index
    %c0_32 = arith.constant 0 : index
    %c0_33 = arith.constant 0 : index
    %42 = vector.load %arg13[%c1_31, %c0_32, %c0_33] : memref<18x18x128xf32, #tpu.memory_space<vmem>>, vector<16x16x128xf32>
    %c3 = arith.constant 3 : index
    %c0_34 = arith.constant 0 : index
    %43 = vector.load %arg4[%c3, %c0_34] : memref<9x128xf32, #tpu.memory_space<vmem>>, vector<1x128xf32>
    %44 = vector.shape_cast %43 : vector<1x128xf32> to vector<128xf32>
    %45 = vector.shape_cast %44 : vector<128xf32> to vector<1x1x128xf32>
    %46 = vector.broadcast %45 : vector<1x1x128xf32> to vector<16x16x128xf32>
    %47 = arith.mulf %42, %46 : vector<16x16x128xf32>
    %48 = arith.addf %41, %47 : vector<16x16x128xf32>
    %c1_35 = arith.constant 1 : index
    %c1_36 = arith.constant 1 : index
    %c0_37 = arith.constant 0 : index
    %49 = vector.load %arg13[%c1_35, %c1_36, %c0_37] : memref<18x18x128xf32, #tpu.memory_space<vmem>>, vector<16x16x128xf32>
    %c4 = arith.constant 4 : index
    %c0_38 = arith.constant 0 : index
    %50 = vector.load %arg4[%c4, %c0_38] : memref<9x128xf32, #tpu.memory_space<vmem>>, vector<1x128xf32>
    %51 = vector.shape_cast %50 : vector<1x128xf32> to vector<128xf32>
    %52 = vector.shape_cast %51 : vector<128xf32> to vector<1x1x128xf32>
    %53 = vector.broadcast %52 : vector<1x1x128xf32> to vector<16x16x128xf32>
    %54 = arith.mulf %49, %53 : vector<16x16x128xf32>
    %55 = arith.addf %48, %54 : vector<16x16x128xf32>
    %c1_39 = arith.constant 1 : index
    %c2_40 = arith.constant 2 : index
    %c0_41 = arith.constant 0 : index
    %56 = vector.load %arg13[%c1_39, %c2_40, %c0_41] : memref<18x18x128xf32, #tpu.memory_space<vmem>>, vector<16x16x128xf32>
    %c5 = arith.constant 5 : index
    %c0_42 = arith.constant 0 : index
    %57 = vector.load %arg4[%c5, %c0_42] : memref<9x128xf32, #tpu.memory_space<vmem>>, vector<1x128xf32>
    %58 = vector.shape_cast %57 : vector<1x128xf32> to vector<128xf32>
    %59 = vector.shape_cast %58 : vector<128xf32> to vector<1x1x128xf32>
    %60 = vector.broadcast %59 : vector<1x1x128xf32> to vector<16x16x128xf32>
    %61 = arith.mulf %56, %60 : vector<16x16x128xf32>
    %62 = arith.addf %55, %61 : vector<16x16x128xf32>
    %c2_43 = arith.constant 2 : index
    %c0_44 = arith.constant 0 : index
    %c0_45 = arith.constant 0 : index
    %63 = vector.load %arg13[%c2_43, %c0_44, %c0_45] : memref<18x18x128xf32, #tpu.memory_space<vmem>>, vector<16x16x128xf32>
    %c6 = arith.constant 6 : index
    %c0_46 = arith.constant 0 : index
    %64 = vector.load %arg4[%c6, %c0_46] : memref<9x128xf32, #tpu.memory_space<vmem>>, vector<1x128xf32>
    %65 = vector.shape_cast %64 : vector<1x128xf32> to vector<128xf32>
    %66 = vector.shape_cast %65 : vector<128xf32> to vector<1x1x128xf32>
    %67 = vector.broadcast %66 : vector<1x1x128xf32> to vector<16x16x128xf32>
    %68 = arith.mulf %63, %67 : vector<16x16x128xf32>
    %69 = arith.addf %62, %68 : vector<16x16x128xf32>
    %c2_47 = arith.constant 2 : index
    %c1_48 = arith.constant 1 : index
    %c0_49 = arith.constant 0 : index
    %70 = vector.load %arg13[%c2_47, %c1_48, %c0_49] : memref<18x18x128xf32, #tpu.memory_space<vmem>>, vector<16x16x128xf32>
    %c7 = arith.constant 7 : index
    %c0_50 = arith.constant 0 : index
    %71 = vector.load %arg4[%c7, %c0_50] : memref<9x128xf32, #tpu.memory_space<vmem>>, vector<1x128xf32>
    %72 = vector.shape_cast %71 : vector<1x128xf32> to vector<128xf32>
    %73 = vector.shape_cast %72 : vector<128xf32> to vector<1x1x128xf32>
    %74 = vector.broadcast %73 : vector<1x1x128xf32> to vector<16x16x128xf32>
    %75 = arith.mulf %70, %74 : vector<16x16x128xf32>
    %76 = arith.addf %69, %75 : vector<16x16x128xf32>
    %c2_51 = arith.constant 2 : index
    %c2_52 = arith.constant 2 : index
    %c0_53 = arith.constant 0 : index
    %77 = vector.load %arg13[%c2_51, %c2_52, %c0_53] : memref<18x18x128xf32, #tpu.memory_space<vmem>>, vector<16x16x128xf32>
    %c8 = arith.constant 8 : index
    %c0_54 = arith.constant 0 : index
    %78 = vector.load %arg4[%c8, %c0_54] : memref<9x128xf32, #tpu.memory_space<vmem>>, vector<1x128xf32>
    %79 = vector.shape_cast %78 : vector<1x128xf32> to vector<128xf32>
    %80 = vector.shape_cast %79 : vector<128xf32> to vector<1x1x128xf32>
    %81 = vector.broadcast %80 : vector<1x1x128xf32> to vector<16x16x128xf32>
    %82 = arith.mulf %77, %81 : vector<16x16x128xf32>
    %83 = arith.addf %76, %82 : vector<16x16x128xf32>
    %c0_55 = arith.constant 0 : index
    %c0_56 = arith.constant 0 : index
    %84 = vector.load %arg5[%c0_55, %c0_56] : memref<1x128xf32, #tpu.memory_space<vmem>>, vector<1x128xf32>
    %85 = vector.shape_cast %84 : vector<1x128xf32> to vector<1x1x128xf32>
    %86 = vector.broadcast %85 : vector<1x1x128xf32> to vector<16x16x128xf32>
    %87 = arith.addf %83, %86 : vector<16x16x128xf32>
    %88 = vector.shape_cast %87 : vector<16x16x128xf32> to vector<256x128xf32>
    %cst_57 = arith.constant dense<0.000000e+00> : vector<128xf32>
    %89 = vector.multi_reduction <add>, %88, %cst_57 [0] : vector<256x128xf32> to vector<128xf32>
    %90 = vector.shape_cast %89 : vector<128xf32> to vector<1x128xf32>
    %cst_58 = arith.constant 2.560000e+02 : f32
    %91 = vector.broadcast %cst_58 : f32 to vector<1x128xf32>
    %92 = arith.divf %90, %91 : vector<1x128xf32>
    %c0_59 = arith.constant 0 : index
    %c0_60 = arith.constant 0 : index
    %93 = vector.load %arg6[%c0_59, %c0_60] : memref<128x32xf32, #tpu.memory_space<vmem>>, vector<128x32xf32>
    %cst_61 = arith.constant dense<0.000000e+00> : vector<1x32xf32>
    %94 = tpu.matmul %92, %93, %cst_61 {dimension_numbers = #tpu.dot_dimension_numbers<[1], [0], [0], [1], [0, 0, 1, 1], [], []>} : vector<1x128xf32>, vector<128x32xf32>, vector<1x32xf32> -> vector<1x32xf32>
    %c0_62 = arith.constant 0 : index
    %c0_63 = arith.constant 0 : index
    %95 = vector.load %arg7[%c0_62, %c0_63] : memref<1x32xf32, #tpu.memory_space<vmem>>, vector<1x32xf32>
    %96 = arith.addf %94, %95 : vector<1x32xf32>
    %cst_64 = arith.constant 0.000000e+00 : f32
    %97 = vector.broadcast %cst_64 : f32 to vector<1x32xf32>
    %98 = arith.maximumf %96, %97 : vector<1x32xf32>
    %c0_65 = arith.constant 0 : index
    %c0_66 = arith.constant 0 : index
    %99 = vector.load %arg8[%c0_65, %c0_66] : memref<32x128xf32, #tpu.memory_space<vmem>>, vector<32x128xf32>
    %cst_67 = arith.constant dense<0.000000e+00> : vector<1x128xf32>
    %100 = tpu.matmul %98, %99, %cst_67 {dimension_numbers = #tpu.dot_dimension_numbers<[1], [0], [0], [1], [0, 0, 1, 1], [], []>} : vector<1x32xf32>, vector<32x128xf32>, vector<1x128xf32> -> vector<1x128xf32>
    %c0_68 = arith.constant 0 : index
    %c0_69 = arith.constant 0 : index
    %101 = vector.load %arg9[%c0_68, %c0_69] : memref<1x128xf32, #tpu.memory_space<vmem>>, vector<1x128xf32>
    %102 = arith.addf %100, %101 : vector<1x128xf32>
    %cst_70 = arith.constant 3.000000e+00 : f32
    %103 = vector.broadcast %cst_70 : f32 to vector<1x128xf32>
    %104 = arith.addf %102, %103 : vector<1x128xf32>
    %cst_71 = arith.constant 0.000000e+00 : f32
    %cst_72 = arith.constant 6.000000e+00 : f32
    %105 = vector.broadcast %cst_71 : f32 to vector<1x128xf32>
    %106 = arith.maximumf %105, %104 : vector<1x128xf32>
    %107 = vector.broadcast %cst_72 : f32 to vector<1x128xf32>
    %108 = arith.minimumf %107, %106 : vector<1x128xf32>
    %cst_73 = arith.constant 0.166666672 : f32
    %109 = vector.broadcast %cst_73 : f32 to vector<1x128xf32>
    %110 = arith.mulf %108, %109 : vector<1x128xf32>
    %111 = vector.broadcast %110 : vector<1x128xf32> to vector<256x128xf32>
    %112 = arith.mulf %88, %111 : vector<256x128xf32>
    %c0_74 = arith.constant 0 : index
    %c0_75 = arith.constant 0 : index
    %113 = vector.load %arg10[%c0_74, %c0_75] : memref<16x128xf32, #tpu.memory_space<vmem>>, vector<16x128xf32>
    %cst_76 = arith.constant dense<0.000000e+00> : vector<16x256xf32>
    %114 = tpu.matmul %113, %112, %cst_76 {dimension_numbers = #tpu.dot_dimension_numbers<[1], [1], [0], [0], [0, 0, 1, 0], [], []>} : vector<16x128xf32>, vector<256x128xf32>, vector<16x256xf32> -> vector<16x256xf32>
    %c0_77 = arith.constant 0 : index
    %c0_78 = arith.constant 0 : index
    %115 = vector.load %arg11[%c0_77, %c0_78] : memref<16x1xf32, #tpu.memory_space<vmem>>, vector<16x1xf32>
    %116 = vector.broadcast %115 : vector<16x1xf32> to vector<16x256xf32>
    %117 = arith.addf %114, %116 : vector<16x256xf32>
    %cst_79 = arith.constant 3.000000e+00 : f32
    %118 = vector.broadcast %cst_79 : f32 to vector<16x256xf32>
    %119 = arith.addf %117, %118 : vector<16x256xf32>
    %cst_80 = arith.constant 0.000000e+00 : f32
    %cst_81 = arith.constant 6.000000e+00 : f32
    %120 = vector.broadcast %cst_80 : f32 to vector<16x256xf32>
    %121 = arith.maximumf %120, %119 : vector<16x256xf32>
    %122 = vector.broadcast %cst_81 : f32 to vector<16x256xf32>
    %123 = arith.minimumf %122, %121 : vector<16x256xf32>
    %cst_82 = arith.constant 0.166666672 : f32
    %124 = vector.broadcast %cst_82 : f32 to vector<16x256xf32>
    %125 = arith.mulf %123, %124 : vector<16x256xf32>
    %126 = arith.mulf %117, %125 : vector<16x256xf32>
    %127 = arith.addf %126, %3 : vector<16x256xf32>
    %c0_83 = arith.constant 0 : index
    %c0_84 = arith.constant 0 : index
    %c0_85 = arith.constant 0 : index
    %128 = vector.load %arg12[%c0_83, %c0_84, %c0_85] : memref<1x16x256xf32, #tpu.memory_space<vmem>>, vector<1x16x256xf32>
    %129 = vector.shape_cast %128 : vector<1x16x256xf32> to vector<16x256xf32>
    %130 = vector.shape_cast %127 : vector<16x256xf32> to vector<1x16x256xf32>
    tpu.vector_store %arg12[%c0_83, %c0_84, %c0_85], %130 {strides = array<i32>} : memref<1x16x256xf32, #tpu.memory_space<vmem>>, vector<1x16x256xf32>,
    return
  }
  func.func @transform_0(%arg0: i32) -> (i32, i32, i32) {
    %c0_i32 = arith.constant 0 : i32
    %c0_i32_0 = arith.constant 0 : i32
    %c0_i32_1 = arith.constant 0 : i32
    return %arg0, %c0_i32, %c0_i32_0 : i32, i32, i32
  }
  func.func @transform_1(%arg0: i32) -> (i32, i32) {
    %c0_i32 = arith.constant 0 : i32
    %c0_i32_0 = arith.constant 0 : i32
    %c0_i32_1 = arith.constant 0 : i32
    return %c0_i32, %c0_i32_0 : i32, i32
  }
  func.func @transform_2(%arg0: i32) -> (i32, i32) {
    %c0_i32 = arith.constant 0 : i32
    %c0_i32_0 = arith.constant 0 : i32
    %c0_i32_1 = arith.constant 0 : i32
    return %c0_i32, %c0_i32_0 : i32, i32
  }
  func.func @transform_3(%arg0: i32) -> (i32, i32) {
    %c0_i32 = arith.constant 0 : i32
    %c0_i32_0 = arith.constant 0 : i32
    %c0_i32_1 = arith.constant 0 : i32
    return %c0_i32, %c0_i32_0 : i32, i32
  }
  func.func @transform_4(%arg0: i32) -> (i32, i32) {
    %c0_i32 = arith.constant 0 : i32
    %c0_i32_0 = arith.constant 0 : i32
    %c0_i32_1 = arith.constant 0 : i32
    return %c0_i32, %c0_i32_0 : i32, i32
  }
  func.func @transform_5(%arg0: i32) -> (i32, i32) {
    %c0_i32 = arith.constant 0 : i32
    %c0_i32_0 = arith.constant 0 : i32
    %c0_i32_1 = arith.constant 0 : i32
    return %c0_i32, %c0_i32_0 : i32, i32
  }
  func.func @transform_6(%arg0: i32) -> (i32, i32) {
    %c0_i32 = arith.constant 0 : i32
    %c0_i32_0 = arith.constant 0 : i32
    %c0_i32_1 = arith.constant 0 : i32
    return %c0_i32, %c0_i32_0 : i32, i32
  }
  func.func @transform_7(%arg0: i32) -> (i32, i32) {
    %c0_i32 = arith.constant 0 : i32
    %c0_i32_0 = arith.constant 0 : i32
    %c0_i32_1 = arith.constant 0 : i32
    return %c0_i32, %c0_i32_0 : i32, i32
  }
  func.func @transform_8(%arg0: i32) -> (i32, i32) {
    %c0_i32 = arith.constant 0 : i32
    %c0_i32_0 = arith.constant 0 : i32
    %c0_i32_1 = arith.constant 0 : i32
    return %c0_i32, %c0_i32_0 : i32, i32
  }
  func.func @transform_9(%arg0: i32) -> (i32, i32) {
    %c0_i32 = arith.constant 0 : i32
    %c0_i32_0 = arith.constant 0 : i32
    %c0_i32_1 = arith.constant 0 : i32
    return %c0_i32, %c0_i32_0 : i32, i32
  }
  func.func @transform_10(%arg0: i32) -> (i32, i32) {
    %c0_i32 = arith.constant 0 : i32
    %c0_i32_0 = arith.constant 0 : i32
    %c0_i32_1 = arith.constant 0 : i32
    return %c0_i32, %c0_i32_0 : i32, i32
  }
  func.func @transform_11(%arg0: i32) -> (i32, i32, i32) {
    %c0_i32 = arith.constant 0 : i32
    %c0_i32_0 = arith.constant 0 : i32
    %c0_i32_1 = arith.constant 0 : i32
    return %arg0, %c0_i32, %c0_i32_0 : i32, i32, i32
  }
}

</mosaic_0001>

<llo_original>
// kernel: tpu_custom_call.1
$region0: #{tpu_custom_call.1}
  #allocation0 [shape = 'u32[]', space=smem, size = 0x4, offset = 0x4, fixed_abs, tag = 'smem constant byte address 0x4 - core index']
  #allocation1 [shape = 'u32[144,128]{1,0:T(1,128)}', space=vmem, size = 0x12000, scoped, tag = 'internal scratch']
  #allocation2 [shape = 'f32[18,18,128]{2,1,0:T(8,128)}', space=vmem, size = 0x36000, scoped, tag = 'scratch operand']
  %s0 = inlined_call_operand.vmem [shape: f32[2,16,256], index: 0, kind: input, shape index: {}]
  %s1 = inlined_call_operand.vmem [shape: f32[16,128], index: 1, kind: input, shape index: {}]
  %s2 = inlined_call_operand.vmem [shape: f32[1,128], index: 2, kind: input, shape index: {}]
  %s3 = inlined_call_operand.vmem [shape: f32[9,128], index: 3, kind: input, shape index: {}]
  %s4 = inlined_call_operand.vmem [shape: f32[1,128], index: 4, kind: input, shape index: {}]
  %s5 = inlined_call_operand.vmem [shape: f32[128,32], index: 5, kind: input, shape index: {}]
  %s6 = inlined_call_operand.vmem [shape: f32[1,32], index: 6, kind: input, shape index: {}]
  %s7 = inlined_call_operand.vmem [shape: f32[32,128], index: 7, kind: input, shape index: {}]
  %s8 = inlined_call_operand.vmem [shape: f32[1,128], index: 8, kind: input, shape index: {}]
  %s9 = inlined_call_operand.vmem [shape: f32[16,128], index: 9, kind: input, shape index: {}]
  %s10 = inlined_call_operand.vmem [shape: f32[16,1], index: 10, kind: input, shape index: {}]
  %s11 = inlined_call_operand.hbm [shape: f32[2,16,256], index: 11, kind: output, shape index: {}]
  %s12 = sld [smem:[#allocation0]]
  $region77: #{tpu_custom_call.1} parent=0
    _
  %s14 = ssub.s32 1, %s12
  %s15 = scalar_select 0, %s14, %s12
  $region1: #{tpu_custom_call.1} parent=0
    #allocation3 [shape = 'u8[32768]{0}', space=vmem, size = 0x8000, scoped, tag = 'output window, operand 0']
    #allocation4 [shape = 's32[2]{0}', space=sflag, size = 0x8, scoped, tag = 'scoped memory for tpu_custom_call.1']
    %16 = vsyncpa [#allocation4], 0
    %s17 = scalar_lea.sflag [#allocation4], 1
    %18 = vsyncpa %s17, 0
    loop: start=0, step=1, limit=4
    $region2: #{tpu_custom_call.1} parent=1 // loop_pre_header
      _
    $region3: #{tpu_custom_call.1} parent=1 // loop_header
      %s20 = sphi 0, %s24
      %p21 = scmp.ge.s32.totalorder %s20, 4
      %s30 = sphi 0, %s32
      %s33 = sphi 0, %s30
      %s34 = sphi 0, %s33
      %s50 = sphi 0, %s34
      %s54 = sphi 0, %s54
      %s56 = sphi 0, %s54
      %s57 = sphi 0, %s56
      %s71 = sphi 0, %s57
      %s75 = sphi 0, %s75
      %s77 = sphi 0, %s75
      %s78 = sphi 0, %s77
      %s92 = sphi 0, %s78
      %s96 = sphi 0, %s96
      %s98 = sphi 0, %s96
      %s99 = sphi 0, %s98
      %s113 = sphi 0, %s99
      %s117 = sphi 0, %s117
      %s119 = sphi 0, %s117
      %s120 = sphi 0, %s119
      %s134 = sphi 0, %s120
      %s138 = sphi 0, %s138
      %s140 = sphi 0, %s138
      %s141 = sphi 0, %s140
      %s155 = sphi 0, %s141
      %s159 = sphi 0, %s159
      %s161 = sphi 0, %s159
      %s162 = sphi 0, %s161
      %s176 = sphi 0, %s162
      %s180 = sphi 0, %s180
      %s182 = sphi 0, %s180
      %s183 = sphi 0, %s182
      %s197 = sphi 0, %s183
      %s201 = sphi 0, %s201
      %s203 = sphi 0, %s201
      %s204 = sphi 0, %s203
      %s218 = sphi 0, %s204
      %s222 = sphi 0, %s222
      %s224 = sphi 0, %s222
      %s225 = sphi 0, %s224
      %s239 = sphi 0, %s225
      %s243 = sphi 0, %s243
      %s245 = sphi 0, %s243
      %s246 = sphi 0, %s245
      %s260 = sphi 0, %s246
      %s266 = sphi 0, %s268
      %s269 = sphi 0, %s266
      %s270 = sphi 0, %s269
      %s286 = sphi 0, %s270
    $region4: #{tpu_custom_call.1} parent=1 // loop_header_branch
      %23 = sbr.rel (%p21) target = $region8
    $region5: #{tpu_custom_call.1} parent=1 // loop_body
      %s25 = ssub.s32 %s20, 1
      %s26 = ssub.s32 %s20, 2
      %s27 = sadd.s32 %s20, 1
      %s28 = ssub.s32 %s20, %s27
      %p29 = scmp.eq.s32.totalorder %s28, 0
      %s31 = sadd.s32 %s30, 1
      %s32 = scalar_select %p29, %s30, %s31
      %p35 = pneg %p29
      %p36 = scmp.eq.s32.totalorder %s20, 1
      %p37 = por %p35, %p36
      %p38 = scmp.ne.s32.totalorder %s30, %s33
      %p39 = scmp.eq.s32.totalorder %s20, 0
      %p40 = por %p38, %p39
      %p41 = scmp.ne.s32.totalorder %s30, %s33
      %p42 = scmp.eq.s32.totalorder %s25, 1
      %p43 = por %p41, %p42
      %p44 = scmp.ne.s32.totalorder %s33, %s34
      %p45 = scmp.eq.s32.totalorder %s25, 0
      %p46 = por %p44, %p45
      %p47 = scmp.ne.s32.totalorder %s33, %s34
      %p48 = scmp.eq.s32.totalorder %s26, 1
      %p49 = por %p47, %p48
      %p51 = scmp.ne.s32.totalorder %s34, %s50
      %p52 = scmp.eq.s32.totalorder %s26, 0
      %p53 = por %p51, %p52
      %s55 = sadd.s32 %s54, 1
      %p58 = scmp.eq.s32.totalorder %s20, 1
      %p59 = scmp.ne.s32.totalorder %s54, %s56
      %p60 = scmp.eq.s32.totalorder %s20, 0
      %p61 = por %p59, %p60
      %p62 = scmp.ne.s32.totalorder %s54, %s56
      %p63 = scmp.eq.s32.totalorder %s25, 1
      %p64 = por %p62, %p63
      %p65 = scmp.ne.s32.totalorder %s56, %s57
      %p66 = scmp.eq.s32.totalorder %s25, 0
      %p67 = por %p65, %p66
      %p68 = scmp.ne.s32.totalorder %s56, %s57
      %p69 = scmp.eq.s32.totalorder %s26, 1
      %p70 = por %p68, %p69
      %p72 = scmp.ne.s32.totalorder %s57, %s71
      %p73 = scmp.eq.s32.totalorder %s26, 0
      %p74 = por %p72, %p73
      %s76 = sadd.s32 %s75, 1
      %p79 = scmp.eq.s32.totalorder %s20, 1
      %p80 = scmp.ne.s32.totalorder %s75, %s77
      %p81 = scmp.eq.s32.totalorder %s20, 0
      %p82 = por %p80, %p81
      %p83 = scmp.ne.s32.totalorder %s75, %s77
      %p84 = scmp.eq.s32.totalorder %s25, 1
      %p85 = por %p83, %p84
      %p86 = scmp.ne.s32.totalorder %s77, %s78
      %p87 = scmp.eq.s32.totalorder %s25, 0
      %p88 = por %p86, %p87
      %p89 = scmp.ne.s32.totalorder %s77, %s78
      %p90 = scmp.eq.s32.totalorder %s26, 1
      %p91 = por %p89, %p90
      %p93 = scmp.ne.s32.totalorder %s78, %s92
      %p94 = scmp.eq.s32.totalorder %s26, 0
      %p95 = por %p93, %p94
      %s97 = sadd.s32 %s96, 1
      %p100 = scmp.eq.s32.totalorder %s20, 1
      %p101 = scmp.ne.s32.totalorder %s96, %s98
      %p102 = scmp.eq.s32.totalorder %s20, 0
      %p103 = por %p101, %p102
      %p104 = scmp.ne.s32.totalorder %s96, %s98
      %p105 = scmp.eq.s32.totalorder %s25, 1
      %p106 = por %p104, %p105
      %p107 = scmp.ne.s32.totalorder %s98, %s99
      %p108 = scmp.eq.s32.totalorder %s25, 0
      %p109 = por %p107, %p108
      %p110 = scmp.ne.s32.totalorder %s98, %s99
      %p111 = scmp.eq.s32.totalorder %s26, 1
      %p112 = por %p110, %p111
      %p114 = scmp.ne.s32.totalorder %s99, %s113
      %p115 = scmp.eq.s32.totalorder %s26, 0
      %p116 = por %p114, %p115
      %s118 = sadd.s32 %s117, 1
      %p121 = scmp.eq.s32.totalorder %s20, 1
      %p122 = scmp.ne.s32.totalorder %s117, %s119
      %p123 = scmp.eq.s32.totalorder %s20, 0
      %p124 = por %p122, %p123
      %p125 = scmp.ne.s32.totalorder %s117, %s119
      %p126 = scmp.eq.s32.totalorder %s25, 1
      %p127 = por %p125, %p126
      %p128 = scmp.ne.s32.totalorder %s119, %s120
      %p129 = scmp.eq.s32.totalorder %s25, 0
      %p130 = por %p128, %p129
      %p131 = scmp.ne.s32.totalorder %s119, %s120
      %p132 = scmp.eq.s32.totalorder %s26, 1
      %p133 = por %p131, %p132
      %p135 = scmp.ne.s32.totalorder %s120, %s134
      %p136 = scmp.eq.s32.totalorder %s26, 0
      %p137 = por %p135, %p136
      %s139 = sadd.s32 %s138, 1
      %p142 = scmp.eq.s32.totalorder %s20, 1
      %p143 = scmp.ne.s32.totalorder %s138, %s140
      %p144 = scmp.eq.s32.totalorder %s20, 0
      %p145 = por %p143, %p144
      %p146 = scmp.ne.s32.totalorder %s138, %s140
      %p147 = scmp.eq.s32.totalorder %s25, 1
      %p148 = por %p146, %p147
      %p149 = scmp.ne.s32.totalorder %s140, %s141
      %p150 = scmp.eq.s32.totalorder %s25, 0
      %p151 = por %p149, %p150
      %p152 = scmp.ne.s32.totalorder %s140, %s141
      %p153 = scmp.eq.s32.totalorder %s26, 1
      %p154 = por %p152, %p153
      %p156 = scmp.ne.s32.totalorder %s141, %s155
      %p157 = scmp.eq.s32.totalorder %s26, 0
      %p158 = por %p156, %p157
      %s160 = sadd.s32 %s159, 1
      %p163 = scmp.eq.s32.totalorder %s20, 1
      %p164 = scmp.ne.s32.totalorder %s159, %s161
      %p165 = scmp.eq.s32.totalorder %s20, 0
      %p166 = por %p164, %p165
      %p167 = scmp.ne.s32.totalorder %s159, %s161
      %p168 = scmp.eq.s32.totalorder %s25, 1
      %p169 = por %p167, %p168
      %p170 = scmp.ne.s32.totalorder %s161, %s162
      %p171 = scmp.eq.s32.totalorder %s25, 0
      %p172 = por %p170, %p171
      %p173 = scmp.ne.s32.totalorder %s161, %s162
      %p174 = scmp.eq.s32.totalorder %s26, 1
      %p175 = por %p173, %p174
      %p177 = scmp.ne.s32.totalorder %s162, %s176
      %p178 = scmp.eq.s32.totalorder %s26, 0
      %p179 = por %p177, %p178
      %s181 = sadd.s32 %s180, 1
      %p184 = scmp.eq.s32.totalorder %s20, 1
      %p185 = scmp.ne.s32.totalorder %s180, %s182
      %p186 = scmp.eq.s32.totalorder %s20, 0
      %p187 = por %p185, %p186
      %p188 = scmp.ne.s32.totalorder %s180, %s182
      %p189 = scmp.eq.s32.totalorder %s25, 1
      %p190 = por %p188, %p189
      %p191 = scmp.ne.s32.totalorder %s182, %s183
      %p192 = scmp.eq.s32.totalorder %s25, 0
      %p193 = por %p191, %p192
      %p194 = scmp.ne.s32.totalorder %s182, %s183
      %p195 = scmp.eq.s32.totalorder %s26, 1
      %p196 = por %p194, %p195
      %p198 = scmp.ne.s32.totalorder %s183, %s197
      %p199 = scmp.eq.s32.totalorder %s26, 0
      %p200 = por %p198, %p199
      %s202 = sadd.s32 %s201, 1
      %p205 = scmp.eq.s32.totalorder %s20, 1
      %p206 = scmp.ne.s32.totalorder %s201, %s203
      %p207 = scmp.eq.s32.totalorder %s20, 0
      %p208 = por %p206, %p207
      %p209 = scmp.ne.s32.totalorder %s201, %s203
      %p210 = scmp.eq.s32.totalorder %s25, 1
      %p211 = por %p209, %p210
      %p212 = scmp.ne.s32.totalorder %s203, %s204
      %p213 = scmp.eq.s32.totalorder %s25, 0
      %p214 = por %p212, %p213
      %p215 = scmp.ne.s32.totalorder %s203, %s204
      %p216 = scmp.eq.s32.totalorder %s26, 1
      %p217 = por %p215, %p216
      %p219 = scmp.ne.s32.totalorder %s204, %s218
      %p220 = scmp.eq.s32.totalorder %s26, 0
      %p221 = por %p219, %p220
      %s223 = sadd.s32 %s222, 1
      %p226 = scmp.eq.s32.totalorder %s20, 1
      %p227 = scmp.ne.s32.totalorder %s222, %s224
      %p228 = scmp.eq.s32.totalorder %s20, 0
      %p229 = por %p227, %p228
      %p230 = scmp.ne.s32.totalorder %s222, %s224
      %p231 = scmp.eq.s32.totalorder %s25, 1
      %p232 = por %p230, %p231
      %p233 = scmp.ne.s32.totalorder %s224, %s225
      %p234 = scmp.eq.s32.totalorder %s25, 0
      %p235 = por %p233, %p234
      %p236 = scmp.ne.s32.totalorder %s224, %s225
      %p237 = scmp.eq.s32.totalorder %s26, 1
      %p238 = por %p236, %p237
      %p240 = scmp.ne.s32.totalorder %s225, %s239
      %p241 = scmp.eq.s32.totalorder %s26, 0
      %p242 = por %p240, %p241
      %s244 = sadd.s32 %s243, 1
      %p247 = scmp.eq.s32.totalorder %s20, 1
      %p248 = scmp.ne.s32.totalorder %s243, %s245
      %p249 = scmp.eq.s32.totalorder %s20, 0
      %p250 = por %p248, %p249
      %p251 = scmp.ne.s32.totalorder %s243, %s245
      %p252 = scmp.eq.s32.totalorder %s25, 1
      %p253 = por %p251, %p252
      %p254 = scmp.ne.s32.totalorder %s245, %s246
      %p255 = scmp.eq.s32.totalorder %s25, 0
      %p256 = por %p254, %p255
      %p257 = scmp.ne.s32.totalorder %s245, %s246
      %p258 = scmp.eq.s32.totalorder %s26, 1
      %p259 = por %p257, %p258
      %p261 = scmp.ne.s32.totalorder %s246, %s260
      %p262 = scmp.eq.s32.totalorder %s26, 0
      %p263 = por %p261, %p262
      %s264 = ssub.s32 %s20, %s27
      %p265 = scmp.eq.s32.totalorder %s264, 0
      %s267 = sadd.s32 %s266, 1
      %s268 = scalar_select %p265, %s266, %s267
      %p271 = pneg %p265
      %p272 = scmp.eq.s32.totalorder %s20, 1
      %p273 = por %p271, %p272
      %p274 = scmp.ne.s32.totalorder %s266, %s269
      %p275 = scmp.eq.s32.totalorder %s20, 0
      %p276 = por %p274, %p275
      %p277 = scmp.ne.s32.totalorder %s266, %s269
      %p278 = scmp.eq.s32.totalorder %s25, 1
      %p279 = por %p277, %p278
      %p280 = scmp.ne.s32.totalorder %s269, %s270
      %p281 = scmp.eq.s32.totalorder %s25, 0
      %p282 = por %p280, %p281
      %p283 = scmp.ne.s32.totalorder %s269, %s270
      %p284 = scmp.eq.s32.totalorder %s26, 1
      %p285 = por %p283, %p284
      %p287 = scmp.ne.s32.totalorder %s270, %s286
      %p288 = scmp.eq.s32.totalorder %s26, 0
      %p289 = por %p287, %p288
      %p290 = scmp.le.s32.totalorder 1, %s20
      %p291 = scmp.lt.s32.totalorder %s20, 3
      %p292 = pnand %p290, %p291
      %p293 = pneg %p292
      // Predicated region
      $region9: #{tpu_custom_call.1} parent=5 // pred_check
        _
      $region10: #{tpu_custom_call.1} parent=5 // pred_check_branch
        %295 = sbr.rel (%p292) target = $region12
      $region11: #{tpu_custom_call.1} parent=5 // pred_region
        %s296 = ssub.s32 %s20, 1
        // Predicated region
        $region13: #{tpu_custom_call.1} parent=11 // pred_check
          %p297 = pneg %p67
        $region14: #{tpu_custom_call.1} parent=11 // pred_check_branch
          %299 = sbr.rel (%p297) target = $region16
        $region15: #{tpu_custom_call.1} parent=11 // pred_region
          _
        $region16: #{tpu_custom_call.1} parent=11 // pred_fallthru
          _
        // Predicated region
        $region17: #{tpu_custom_call.1} parent=11 // pred_check
          %p300 = pneg %p88
        $region18: #{tpu_custom_call.1} parent=11 // pred_check_branch
          %302 = sbr.rel (%p300) target = $region20
        $region19: #{tpu_custom_call.1} parent=11 // pred_region
          _
        $region20: #{tpu_custom_call.1} parent=11 // pred_fallthru
          _
        // Predicated region
        $region21: #{tpu_custom_call.1} parent=11 // pred_check
          %p303 = pneg %p109
        $region22: #{tpu_custom_call.1} parent=11 // pred_check_branch
          %305 = sbr.rel (%p303) target = $region24
        $region23: #{tpu_custom_call.1} parent=11 // pred_region
          _
        $region24: #{tpu_custom_call.1} parent=11 // pred_fallthru
          _
        // Predicated region
        $region25: #{tpu_custom_call.1} parent=11 // pred_check
          %p306 = pneg %p130
        $region26: #{tpu_custom_call.1} parent=11 // pred_check_branch
          %308 = sbr.rel (%p306) target = $region28
        $region27: #{tpu_custom_call.1} parent=11 // pred_region
          _
        $region28: #{tpu_custom_call.1} parent=11 // pred_fallthru
          _
        // Predicated region
        $region29: #{tpu_custom_call.1} parent=11 // pred_check
          %p309 = pneg %p151
        $region30: #{tpu_custom_call.1} parent=11 // pred_check_branch
          %311 = sbr.rel (%p309) target = $region32
        $region31: #{tpu_custom_call.1} parent=11 // pred_region
          _
        $region32: #{tpu_custom_call.1} parent=11 // pred_fallthru
          _
        // Predicated region
        $region33: #{tpu_custom_call.1} parent=11 // pred_check
          %p312 = pneg %p172
        $region34: #{tpu_custom_call.1} parent=11 // pred_check_branch
          %314 = sbr.rel (%p312) target = $region36
        $region35: #{tpu_custom_call.1} parent=11 // pred_region
          _
        $region36: #{tpu_custom_call.1} parent=11 // pred_fallthru
          _
        // Predicated region
        $region37: #{tpu_custom_call.1} parent=11 // pred_check
          %p315 = pneg %p193
        $region38: #{tpu_custom_call.1} parent=11 // pred_check_branch
          %317 = sbr.rel (%p315) target = $region40
        $region39: #{tpu_custom_call.1} parent=11 // pred_region
          _
        $region40: #{tpu_custom_call.1} parent=11 // pred_fallthru
          _
        // Predicated region
        $region41: #{tpu_custom_call.1} parent=11 // pred_check
          %p318 = pneg %p214
        $region42: #{tpu_custom_call.1} parent=11 // pred_check_branch
          %320 = sbr.rel (%p318) target = $region44
        $region43: #{tpu_custom_call.1} parent=11 // pred_region
          _
        $region44: #{tpu_custom_call.1} parent=11 // pred_fallthru
          _
        // Predicated region
        $region45: #{tpu_custom_call.1} parent=11 // pred_check
          %p321 = pneg %p235
        $region46: #{tpu_custom_call.1} parent=11 // pred_check_branch
          %323 = sbr.rel (%p321) target = $region48
        $region47: #{tpu_custom_call.1} parent=11 // pred_region
          _
        $region48: #{tpu_custom_call.1} parent=11 // pred_fallthru
          _
        // Predicated region
        $region49: #{tpu_custom_call.1} parent=11 // pred_check
          %p324 = pneg %p256
        $region50: #{tpu_custom_call.1} parent=11 // pred_check_branch
          %326 = sbr.rel (%p324) target = $region52
        $region51: #{tpu_custom_call.1} parent=11 // pred_region
          _
        $region52: #{tpu_custom_call.1} parent=11 // pred_fallthru
          _
      $region12: #{tpu_custom_call.1} parent=5 // pred_fallthru
        _
      %p327 = scmp.lt.s32.totalorder %s20, 2
      // Predicated region
      $region53: #{tpu_custom_call.1} parent=5 // pred_check
        %p328 = pneg %p327
      $region54: #{tpu_custom_call.1} parent=5 // pred_check_branch
        %330 = sbr.rel (%p328) target = $region56
      $region55: #{tpu_custom_call.1} parent=5 // pred_region
        // Predicated region
        $region57: #{tpu_custom_call.1} parent=55 // pred_check
          %p331 = pneg %p40
        $region58: #{tpu_custom_call.1} parent=55 // pred_check_branch
          %333 = sbr.rel (%p331) target = $region60
        $region59: #{tpu_custom_call.1} parent=55 // pred_region
          %p334 = scmp.lt.s32.totalorder %s20, 1
          %s335 = scalar_select %p334, %s20, 1
          %s336 = smul.addr %s335, 4
          %s337 = smul.addr %s336, 8
          %s338 = scalar_lea.vmem %s0, %s337
        $region60: #{tpu_custom_call.1} parent=55 // pred_fallthru
          _
      $region56: #{tpu_custom_call.1} parent=5 // pred_fallthru
        _
      %p339 = scmp.le.s32.totalorder 1, %s20
      %p340 = scmp.lt.s32.totalorder %s20, 3
      %p341 = pnand %p339, %p340
      %p342 = pneg %p341
      // Predicated region
      $region61: #{tpu_custom_call.1} parent=5 // pred_check
        _
      $region62: #{tpu_custom_call.1} parent=5 // pred_check_branch
        %344 = sbr.rel (%p341) target = $region64
      $region63: #{tpu_custom_call.1} parent=5 // pred_region
        %s345 = ssub.s32 %s20, 1
        %p346 = scmp.lt.s32.totalorder %s25, 1
        %s347 = scalar_select %p346, %s25, 1
        %s348 = smul.addr %s347, 4
        %s349 = smul.addr %s348, 8
        %s350 = scalar_lea.vmem %s0, %s349
        %p351 = pneg %p46
        %p352 = pneg %p43
        %p353 = pneg %p67
        %p354 = pneg %p64
        %p355 = pneg %p88
        %p356 = pneg %p85
        %p357 = pneg %p109
        %p358 = pneg %p106
        %p359 = pneg %p130
        %p360 = pneg %p127
        %p361 = pneg %p151
        %p362 = pneg %p148
        %p363 = pneg %p172
        %p364 = pneg %p169
        %p365 = pneg %p193
        %p366 = pneg %p190
        %p367 = pneg %p214
        %p368 = pneg %p211
        %p369 = pneg %p235
        %p370 = pneg %p232
        %p371 = pneg %p256
        %p372 = pneg %p253
        %p373 = pneg %p282
        %p374 = pneg %p279
        %s375 = sand.u32 %s269, 1
        %s376 = scalar_lea.sflag [#allocation4], %s375
        %s377 = sand.u32 %s269, 1
        %s378 = smul.addr %s377, 32
        %s379 = scalar_lea.vmem [#allocation3], %s378
        %p380 = scmp.lt.s32.totalorder %s25, 1
        %s381 = scalar_select %p380, %s25, 1
        %s382 = smul.addr %s381, 4
        %s383 = smul.addr %s382, 8
        %s384 = scalar_lea.vmem %s0, %s383
        %385 = vst [vmem:[#allocation2] sm:$0xff] 0.0
        %386 = vst [vmem:[#allocation2 + $0x8] sm:$0xff] 0.0
        %387 = vst [vmem:[#allocation2 + $0x10] sm:$0x3] 0.0
        %388 = vst [vmem:[#allocation2 + $0x18] sm:$0xff] 0.0
        %389 = vst [vmem:[#allocation2 + $0x20] sm:$0xff] 0.0
        %390 = vst [vmem:[#allocation2 + $0x28] sm:$0x3] 0.0
        %391 = vst [vmem:[#allocation2 + $0x30] sm:$0xff] 0.0
        %392 = vst [vmem:[#allocation2 + $0x38] sm:$0xff] 0.0
        %393 = vst [vmem:[#allocation2 + $0x40] sm:$0x3] 0.0
        %394 = vst [vmem:[#allocation2 + $0x48] sm:$0xff] 0.0
        %395 = vst [vmem:[#allocation2 + $0x50] sm:$0xff] 0.0
        %396 = vst [vmem:[#allocation2 + $0x58] sm:$0x3] 0.0
        %397 = vst [vmem:[#allocation2 + $0x60] sm:$0xff] 0.0
        %398 = vst [vmem:[#allocation2 + $0x68] sm:$0xff] 0.0
        %399 = vst [vmem:[#allocation2 + $0x70] sm:$0x3] 0.0
        %400 = vst [vmem:[#allocation2 + $0x78] sm:$0xff] 0.0
        %401 = vst [vmem:[#allocation2 + $0x80] sm:$0xff] 0.0
        %402 = vst [vmem:[#allocation2 + $0x88] sm:$0x3] 0.0
        %403 = vst [vmem:[#allocation2 + $0x90] sm:$0xff] 0.0
        %404 = vst [vmem:[#allocation2 + $0x98] sm:$0xff] 0.0
        %405 = vst [vmem:[#allocation2 + $0xa0] sm:$0x3] 0.0
        %406 = vst [vmem:[#allocation2 + $0xa8] sm:$0xff] 0.0
        %407 = vst [vmem:[#allocation2 + $0xb0] sm:$0xff] 0.0
        %408 = vst [vmem:[#allocation2 + $0xb8] sm:$0x3] 0.0
        %409 = vst [vmem:[#allocation2 + $0xc0] sm:$0xff] 0.0
        %410 = vst [vmem:[#allocation2 + $0xc8] sm:$0xff] 0.0
        %411 = vst [vmem:[#allocation2 + $0xd0] sm:$0x3] 0.0
        %412 = vst [vmem:[#allocation2 + $0xd8] sm:$0xff] 0.0
        %413 = vst [vmem:[#allocation2 + $0xe0] sm:$0xff] 0.0
        %414 = vst [vmem:[#allocation2 + $0xe8] sm:$0x3] 0.0
        %415 = vst [vmem:[#allocation2 + $0xf0] sm:$0xff] 0.0
        %416 = vst [vmem:[#allocation2 + $0xf8] sm:$0xff] 0.0
        %417 = vst [vmem:[#allocation2 + $0x100] sm:$0x3] 0.0
        %418 = vst [vmem:[#allocation2 + $0x108] sm:$0xff] 0.0
        %419 = vst [vmem:[#allocation2 + $0x110] sm:$0xff] 0.0
        %420 = vst [vmem:[#allocation2 + $0x118] sm:$0x3] 0.0
        %421 = vst [vmem:[#allocation2 + $0x120] sm:$0xff] 0.0
        %422 = vst [vmem:[#allocation2 + $0x128] sm:$0xff] 0.0
        %423 = vst [vmem:[#allocation2 + $0x130] sm:$0x3] 0.0
        %424 = vst [vmem:[#allocation2 + $0x138] sm:$0xff] 0.0
        %425 = vst [vmem:[#allocation2 + $0x140] sm:$0xff] 0.0
        %426 = vst [vmem:[#allocation2 + $0x148] sm:$0x3] 0.0
        %427 = vst [vmem:[#allocation2 + $0x150] sm:$0xff] 0.0
        %428 = vst [vmem:[#allocation2 + $0x158] sm:$0xff] 0.0
        %429 = vst [vmem:[#allocation2 + $0x160] sm:$0x3] 0.0
        %430 = vst [vmem:[#allocation2 + $0x168] sm:$0xff] 0.0
        %431 = vst [vmem:[#allocation2 + $0x170] sm:$0xff] 0.0
        %432 = vst [vmem:[#allocation2 + $0x178] sm:$0x3] 0.0
        %433 = vst [vmem:[#allocation2 + $0x180] sm:$0xff] 0.0
        %434 = vst [vmem:[#allocation2 + $0x188] sm:$0xff] 0.0
        %435 = vst [vmem:[#allocation2 + $0x190] sm:$0x3] 0.0
        %436 = vst [vmem:[#allocation2 + $0x198] sm:$0xff] 0.0
        %437 = vst [vmem:[#allocation2 + $0x1a0] sm:$0xff] 0.0
        %438 = vst [vmem:[#allocation2 + $0x1a8] sm:$0x3] 0.0
        %v439 = vld [vmem:[%s384] sm:$0xff]
        %v440 = vld [vmem:[%s384 + $0x8] sm:$0xff]
        %v441 = vld [vmem:[%s384 + $0x10] sm:$0xff]
        %v442 = vld [vmem:[%s384 + $0x18] sm:$0xff]
        %v443 = vld [vmem:[%s1] sm:$0xff]
        %v444 = vld [vmem:[%s1 + $0x8] sm:$0xff]
        %v445 = vld [vmem:[%s2] sm:$0x1]
        %v447 = vlaneseq
        %v448 = vshrl.u32 %v447, 7
        %v449 = vsub.s32 0, %v448
        %v450 = vrot.slane %v445, %v449
        %452 = vxpose.xlu0.b32.start [1/16] %v439, 128
        %453 = vxpose.xlu0.b32.cont [2/16] %v441, 128
        %454 = vxpose.xlu0.b32.cont [3/16] 0.0, 128
        %455 = vxpose.xlu0.b32.cont [4/16] 0.0, 128
        %456 = vxpose.xlu0.b32.cont [5/16] 0.0, 128
        %457 = vxpose.xlu0.b32.cont [6/16] 0.0, 128
        %458 = vxpose.xlu0.b32.cont [7/16] 0.0, 128
        %459 = vxpose.xlu0.b32.cont [8/16] 0.0, 128
        %460 = vxpose.xlu0.b32.cont [9/16] 0.0, 128
        %461 = vxpose.xlu0.b32.cont [10/16] 0.0, 128
        %462 = vxpose.xlu0.b32.cont [11/16] 0.0, 128
        %463 = vxpose.xlu0.b32.cont [12/16] 0.0, 128
        %464 = vxpose.xlu0.b32.cont [13/16] 0.0, 128
        %465 = vxpose.xlu0.b32.cont [14/16] 0.0, 128
        %466 = vxpose.xlu0.b32.cont [15/16] 0.0, 128
        %467 = vxpose.xlu0.b32.end [16/16] 0.0, 128
        %v468 = vpop.trf.xlu0
        %v469 = vpop.trf.xlu0
        %v470 = vpop.trf.xlu0
        %v471 = vpop.trf.xlu0
        %v472 = vpop.trf.xlu0
        %v473 = vpop.trf.xlu0
        %v474 = vpop.trf.xlu0
        %v475 = vpop.trf.xlu0
        %v476 = vpop.trf.xlu0
        %v477 = vpop.trf.xlu0
        %v478 = vpop.trf.xlu0
        %v479 = vpop.trf.xlu0
        %v480 = vpop.trf.xlu0
        %v481 = vpop.trf.xlu0
        %v482 = vpop.trf.xlu0
        %v483 = vpop.trf.xlu0
        %484 = vxpose.xlu0.b32.start [1/16] %v440, 128
        %485 = vxpose.xlu0.b32.cont [2/16] %v442, 128
        %486 = vxpose.xlu0.b32.cont [3/16] 0.0, 128
        %487 = vxpose.xlu0.b32.cont [4/16] 0.0, 128
        %488 = vxpose.xlu0.b32.cont [5/16] 0.0, 128
        %489 = vxpose.xlu0.b32.cont [6/16] 0.0, 128
        %490 = vxpose.xlu0.b32.cont [7/16] 0.0, 128
        %491 = vxpose.xlu0.b32.cont [8/16] 0.0, 128
        %492 = vxpose.xlu0.b32.cont [9/16] 0.0, 128
        %493 = vxpose.xlu0.b32.cont [10/16] 0.0, 128
        %494 = vxpose.xlu0.b32.cont [11/16] 0.0, 128
        %495 = vxpose.xlu0.b32.cont [12/16] 0.0, 128
        %496 = vxpose.xlu0.b32.cont [13/16] 0.0, 128
        %497 = vxpose.xlu0.b32.cont [14/16] 0.0, 128
        %498 = vxpose.xlu0.b32.cont [15/16] 0.0, 128
        %499 = vxpose.xlu0.b32.end [16/16] 0.0, 128
        %v500 = vpop.trf.xlu0
        %v501 = vpop.trf.xlu0
        %v502 = vpop.trf.xlu0
        %v503 = vpop.trf.xlu0
        %v504 = vpop.trf.xlu0
        %v505 = vpop.trf.xlu0
        %v506 = vpop.trf.xlu0
        %v507 = vpop.trf.xlu0
        %v508 = vpop.trf.xlu0
        %v509 = vpop.trf.xlu0
        %v510 = vpop.trf.xlu0
        %v511 = vpop.trf.xlu0
        %v512 = vpop.trf.xlu0
        %v513 = vpop.trf.xlu0
        %v514 = vpop.trf.xlu0
        %v515 = vpop.trf.xlu0
        %vm516 = vcmask 130048
        %v518 = vsel %vm516, %v468, 0
        %v521 = vsel %vm516, %v469, 0
        %v524 = vsel %vm516, %v470, 0
        %v527 = vsel %vm516, %v471, 0
        %v530 = vsel %vm516, %v472, 0
        %v533 = vsel %vm516, %v473, 0
        %v536 = vsel %vm516, %v474, 0
        %v539 = vsel %vm516, %v475, 0
        %v542 = vsel %vm516, %v476, 0
        %v545 = vsel %vm516, %v477, 0
        %v548 = vsel %vm516, %v478, 0
        %v551 = vsel %vm516, %v479, 0
        %v554 = vsel %vm516, %v480, 0
        %v557 = vsel %vm516, %v481, 0
        %v560 = vsel %vm516, %v482, 0
        %v563 = vsel %vm516, %v483, 0
        %v566 = vsel %vm516, %v500, 0
        %v569 = vsel %vm516, %v501, 0
        %v572 = vsel %vm516, %v502, 0
        %v575 = vsel %vm516, %v503, 0
        %v578 = vsel %vm516, %v504, 0
        %v581 = vsel %vm516, %v505, 0
        %v584 = vsel %vm516, %v506, 0
        %v587 = vsel %vm516, %v507, 0
        %v590 = vsel %vm516, %v508, 0
        %v593 = vsel %vm516, %v509, 0
        %v596 = vsel %vm516, %v510, 0
        %v599 = vsel %vm516, %v511, 0
        %v602 = vsel %vm516, %v512, 0
        %v605 = vsel %vm516, %v513, 0
        %v608 = vsel %vm516, %v514, 0
        %v611 = vsel %vm516, %v515, 0
        %613 = vmatprep.subr.mxu0 0.0
        %614 = vmatpush1.msra.mxu0 %v443
        %615 = vmatprep.subr.mxu0 0.0
        %616 = vmatpush1.msra.mxu0 %v444
        %617 = vmatprep.subr.mxu0 0.0
        %618 = vmatpush1.msra.mxu0 0.0
        %619 = vmatprep.subr.mxu0 0.0
        %620 = vmatpush1.msra.mxu0 0.0
        %621 = vmatprep.subr.mxu0 0.0
        %622 = vmatpush1.msra.mxu0 0.0
        %623 = vmatprep.subr.mxu0 0.0
        %624 = vmatpush1.msra.mxu0 0.0
        %625 = vmatprep.subr.mxu0 0.0
        %626 = vmatpush1.msra.mxu0 0.0
        %627 = vmatprep.subr.mxu0 0.0
        %628 = vmatpush1.msra.mxu0 0.0
        %629 = vmatprep.subr.mxu0 0.0
        %630 = vmatpush1.msra.mxu0 0.0
        %631 = vmatprep.subr.mxu0 0.0
        %632 = vmatpush1.msra.mxu0 0.0
        %633 = vmatprep.subr.mxu0 0.0
        %634 = vmatpush1.msra.mxu0 0.0
        %635 = vmatprep.subr.mxu0 0.0
        %636 = vmatpush1.msra.mxu0 0.0
        %637 = vmatprep.subr.mxu0 0.0
        %638 = vmatpush1.msra.mxu0 0.0
        %639 = vmatprep.subr.mxu0 0.0
        %640 = vmatpush1.msra.mxu0 0.0
        %641 = vmatprep.subr.mxu0 0.0
        %642 = vmatpush1.msra.mxu0 0.0
        %643 = vmatprep.subr.mxu0 0.0
        %644 = vmatpush1.msra.mxu0 0.0
        %645 = vmatprep.subr.mxu0 0.0
        %646 = vmatpush1.msra.mxu0 0.0
        %647 = vmatprep.subr.mxu0 0.0
        %648 = vmatpush1.msra.mxu0 0.0
        %649 = vmatprep.subr.mxu0 0.0
        %650 = vmatpush1.msra.mxu0 0.0
        %651 = vmatprep.subr.mxu0 0.0
        %652 = vmatpush1.msra.mxu0 0.0
        %653 = vmatprep.subr.mxu0 0.0
        %654 = vmatpush1.msra.mxu0 0.0
        %655 = vmatprep.subr.mxu0 0.0
        %656 = vmatpush1.msra.mxu0 0.0
        %657 = vmatprep.subr.mxu0 0.0
        %658 = vmatpush1.msra.mxu0 0.0
        %659 = vmatprep.subr.mxu0 0.0
        %660 = vmatpush1.msra.mxu0 0.0
        %661 = vmatprep.subr.mxu0 0.0
        %662 = vmatpush1.msra.mxu0 0.0
        %663 = vmatprep.subr.mxu0 0.0
        %664 = vmatpush1.msra.mxu0 0.0
        %665 = vmatprep.subr.mxu0 0.0
        %666 = vmatpush1.msra.mxu0 0.0
        %667 = vmatprep.subr.mxu0 0.0
        %668 = vmatpush1.msra.mxu0 0.0
        %669 = vmatprep.subr.mxu0 0.0
        %670 = vmatpush1.msra.mxu0 0.0
        %671 = vmatprep.subr.mxu0 0.0
        %672 = vmatpush1.msra.mxu0 0.0
        %673 = vmatprep.subr.mxu0 0.0
        %674 = vmatpush1.msra.mxu0 0.0
        %675 = vmatprep.subr.mxu0 0.0
        %676 = vmatpush1.msra.mxu0 0.0
        %677 = vmatprep.mubr.f32.mxu0 0.0
        %678 = vmatmul.mubr.f32.gmra.mrb[0].mxu0 %v518
        %v679 = vpop.f32.mrb[0].mxu0
        %v680 = vadd.f32 %v450, %v679
        %v681 = vpop.f32.mrb[0].mxu0
        %682 = vmatprep.mubr.f32.mxu0 0.0
        %683 = vmatmul.mubr.f32.gmra.mrb[0].mxu0 %v521
        %v684 = vpop.f32.mrb[0].mxu0
        %v685 = vadd.f32 %v450, %v684
        %v686 = vpop.f32.mrb[0].mxu0
        %687 = vmatprep.mubr.f32.mxu0 0.0
        %688 = vmatmul.mubr.f32.gmra.mrb[0].mxu0 %v524
        %v689 = vpop.f32.mrb[0].mxu0
        %v690 = vadd.f32 %v450, %v689
        %v691 = vpop.f32.mrb[0].mxu0
        %692 = vmatprep.mubr.f32.mxu0 0.0
        %693 = vmatmul.mubr.f32.gmra.mrb[0].mxu0 %v527
        %v694 = vpop.f32.mrb[0].mxu0
        %v695 = vadd.f32 %v450, %v694
        %v696 = vpop.f32.mrb[0].mxu0
        %697 = vmatprep.mubr.f32.mxu0 0.0
        %698 = vmatmul.mubr.f32.gmra.mrb[0].mxu0 %v530
        %v699 = vpop.f32.mrb[0].mxu0
        %v700 = vadd.f32 %v450, %v699
        %v701 = vpop.f32.mrb[0].mxu0
        %702 = vmatprep.mubr.f32.mxu0 0.0
        %703 = vmatmul.mubr.f32.gmra.mrb[0].mxu0 %v533
        %v704 = vpop.f32.mrb[0].mxu0
        %v705 = vadd.f32 %v450, %v704
        %v706 = vpop.f32.mrb[0].mxu0
        %707 = vmatprep.mubr.f32.mxu0 0.0
        %708 = vmatmul.mubr.f32.gmra.mrb[0].mxu0 %v536
        %v709 = vpop.f32.mrb[0].mxu0
        %v710 = vadd.f32 %v450, %v709
        %v711 = vpop.f32.mrb[0].mxu0
        %712 = vmatprep.mubr.f32.mxu0 0.0
        %713 = vmatmul.mubr.f32.gmra.mrb[0].mxu0 %v539
        %v714 = vpop.f32.mrb[0].mxu0
        %v715 = vadd.f32 %v450, %v714
        %v716 = vpop.f32.mrb[0].mxu0
        %717 = vmatprep.mubr.f32.mxu0 0.0
        %718 = vmatmul.mubr.f32.gmra.mrb[0].mxu0 %v542
        %v719 = vpop.f32.mrb[0].mxu0
        %v720 = vadd.f32 %v450, %v719
        %v721 = vpop.f32.mrb[0].mxu0
        %722 = vmatprep.mubr.f32.mxu0 0.0
        %723 = vmatmul.mubr.f32.gmra.mrb[0].mxu0 %v545
        %v724 = vpop.f32.mrb[0].mxu0
        %v725 = vadd.f32 %v450, %v724
        %v726 = vpop.f32.mrb[0].mxu0
        %727 = vmatprep.mubr.f32.mxu0 0.0
        %728 = vmatmul.mubr.f32.gmra.mrb[0].mxu0 %v548
        %v729 = vpop.f32.mrb[0].mxu0
        %v730 = vadd.f32 %v450, %v729
        %v731 = vpop.f32.mrb[0].mxu0
        %732 = vmatprep.mubr.f32.mxu0 0.0
        %733 = vmatmul.mubr.f32.gmra.mrb[0].mxu0 %v551
        %v734 = vpop.f32.mrb[0].mxu0
        %v735 = vadd.f32 %v450, %v734
        %v736 = vpop.f32.mrb[0].mxu0
        %737 = vmatprep.mubr.f32.mxu0 0.0
        %738 = vmatmul.mubr.f32.gmra.mrb[0].mxu0 %v554
        %v739 = vpop.f32.mrb[0].mxu0
        %v740 = vadd.f32 %v450, %v739
        %v741 = vpop.f32.mrb[0].mxu0
        %742 = vmatprep.mubr.f32.mxu0 0.0
        %743 = vmatmul.mubr.f32.gmra.mrb[0].mxu0 %v557
        %v744 = vpop.f32.mrb[0].mxu0
        %v745 = vadd.f32 %v450, %v744
        %v746 = vpop.f32.mrb[0].mxu0
        %747 = vmatprep.mubr.f32.mxu0 0.0
        %748 = vmatmul.mubr.f32.gmra.mrb[0].mxu0 %v560
        %v749 = vpop.f32.mrb[0].mxu0
        %v750 = vadd.f32 %v450, %v749
        %v751 = vpop.f32.mrb[0].mxu0
        %752 = vmatprep.mubr.f32.mxu0 0.0
        %753 = vmatmul.mubr.f32.gmra.mrb[0].mxu0 %v563
        %v754 = vpop.f32.mrb[0].mxu0
        %v755 = vadd.f32 %v450, %v754
        %v756 = vpop.f32.mrb[0].mxu0
        %757 = vmatprep.mubr.f32.mxu0 0.0
        %758 = vmatmul.mubr.f32.gmra.mrb[0].mxu0 %v566
        %v759 = vpop.f32.mrb[0].mxu0
        %v760 = vadd.f32 %v450, %v759
        %v761 = vpop.f32.mrb[0].mxu0
        %762 = vmatprep.mubr.f32.mxu0 0.0
        %763 = vmatmul.mubr.f32.gmra.mrb[0].mxu0 %v569
        %v764 = vpop.f32.mrb[0].mxu0
        %v765 = vadd.f32 %v450, %v764
        %v766 = vpop.f32.mrb[0].mxu0
        %767 = vmatprep.mubr.f32.mxu0 0.0
        %768 = vmatmul.mubr.f32.gmra.mrb[0].mxu0 %v572
        %v769 = vpop.f32.mrb[0].mxu0
        %v770 = vadd.f32 %v450, %v769
        %v771 = vpop.f32.mrb[0].mxu0
        %772 = vmatprep.mubr.f32.mxu0 0.0
        %773 = vmatmul.mubr.f32.gmra.mrb[0].mxu0 %v575
        %v774 = vpop.f32.mrb[0].mxu0
        %v775 = vadd.f32 %v450, %v774
        %v776 = vpop.f32.mrb[0].mxu0
        %777 = vmatprep.mubr.f32.mxu0 0.0
        %778 = vmatmul.mubr.f32.gmra.mrb[0].mxu0 %v578
        %v779 = vpop.f32.mrb[0].mxu0
        %v780 = vadd.f32 %v450, %v779
        %v781 = vpop.f32.mrb[0].mxu0
        %782 = vmatprep.mubr.f32.mxu0 0.0
        %783 = vmatmul.mubr.f32.gmra.mrb[0].mxu0 %v581
        %v784 = vpop.f32.mrb[0].mxu0
        %v785 = vadd.f32 %v450, %v784
        %v786 = vpop.f32.mrb[0].mxu0
        %787 = vmatprep.mubr.f32.mxu0 0.0
        %788 = vmatmul.mubr.f32.gmra.mrb[0].mxu0 %v584
        %v789 = vpop.f32.mrb[0].mxu0
        %v790 = vadd.f32 %v450, %v789
        %v791 = vpop.f32.mrb[0].mxu0
        %792 = vmatprep.mubr.f32.mxu0 0.0
        %793 = vmatmul.mubr.f32.gmra.mrb[0].mxu0 %v587
        %v794 = vpop.f32.mrb[0].mxu0
        %v795 = vadd.f32 %v450, %v794
        %v796 = vpop.f32.mrb[0].mxu0
        %797 = vmatprep.mubr.f32.mxu0 0.0
        %798 = vmatmul.mubr.f32.gmra.mrb[0].mxu0 %v590
        %v799 = vpop.f32.mrb[0].mxu0
        %v800 = vadd.f32 %v450, %v799
        %v801 = vpop.f32.mrb[0].mxu0
        %802 = vmatprep.mubr.f32.mxu0 0.0
        %803 = vmatmul.mubr.f32.gmra.mrb[0].mxu0 %v593
        %v804 = vpop.f32.mrb[0].mxu0
        %v805 = vadd.f32 %v450, %v804
        %v806 = vpop.f32.mrb[0].mxu0
        %807 = vmatprep.mubr.f32.mxu0 0.0
        %808 = vmatmul.mubr.f32.gmra.mrb[0].mxu0 %v596
        %v809 = vpop.f32.mrb[0].mxu0
        %v810 = vadd.f32 %v450, %v809
        %v811 = vpop.f32.mrb[0].mxu0
        %812 = vmatprep.mubr.f32.mxu0 0.0
        %813 = vmatmul.mubr.f32.gmra.mrb[0].mxu0 %v599
        %v814 = vpop.f32.mrb[0].mxu0
        %v815 = vadd.f32 %v450, %v814
        %v816 = vpop.f32.mrb[0].mxu0
        %817 = vmatprep.mubr.f32.mxu0 0.0
        %818 = vmatmul.mubr.f32.gmra.mrb[0].mxu0 %v602
        %v819 = vpop.f32.mrb[0].mxu0
        %v820 = vadd.f32 %v450, %v819
        %v821 = vpop.f32.mrb[0].mxu0
        %822 = vmatprep.mubr.f32.mxu0 0.0
        %823 = vmatmul.mubr.f32.gmra.mrb[0].mxu0 %v605
        %v824 = vpop.f32.mrb[0].mxu0
        %v825 = vadd.f32 %v450, %v824
        %v826 = vpop.f32.mrb[0].mxu0
        %827 = vmatprep.mubr.f32.mxu0 0.0
        %828 = vmatmul.mubr.f32.gmra.mrb[0].mxu0 %v608
        %v829 = vpop.f32.mrb[0].mxu0
        %v830 = vadd.f32 %v450, %v829
        %v831 = vpop.f32.mrb[0].mxu0
        %832 = vmatprep.mubr.f32.mxu0 0.0
        %833 = vmatmul.mubr.f32.gmra.mrb[0].mxu0 %v611
        %v834 = vpop.f32.mrb[0].mxu0
        %v835 = vadd.f32 %v450, %v834
        %v836 = vpop.f32.mrb[0].mxu0
        %837 = vdwg.mxu0
        %v838 = vadd.f32 %v680, 3.0
        %v839 = vadd.f32 %v685, 3.0
        %v840 = vadd.f32 %v690, 3.0
        %v841 = vadd.f32 %v695, 3.0
        %v842 = vadd.f32 %v700, 3.0
        %v843 = vadd.f32 %v705, 3.0
        %v844 = vadd.f32 %v710, 3.0
        %v845 = vadd.f32 %v715, 3.0
        %v846 = vadd.f32 %v720, 3.0
        %v847 = vadd.f32 %v725, 3.0
        %v848 = vadd.f32 %v730, 3.0
        %v849 = vadd.f32 %v735, 3.0
        %v850 = vadd.f32 %v740, 3.0
        %v851 = vadd.f32 %v745, 3.0
        %v852 = vadd.f32 %v750, 3.0
        %v853 = vadd.f32 %v755, 3.0
        %v854 = vadd.f32 %v760, 3.0
        %v855 = vadd.f32 %v765, 3.0
        %v856 = vadd.f32 %v770, 3.0
        %v857 = vadd.f32 %v775, 3.0
        %v858 = vadd.f32 %v780, 3.0
        %v859 = vadd.f32 %v785, 3.0
        %v860 = vadd.f32 %v790, 3.0
        %v861 = vadd.f32 %v795, 3.0
        %v862 = vadd.f32 %v800, 3.0
        %v863 = vadd.f32 %v805, 3.0
        %v864 = vadd.f32 %v810, 3.0
        %v865 = vadd.f32 %v815, 3.0
        %v866 = vadd.f32 %v820, 3.0
        %v867 = vadd.f32 %v825, 3.0
        %v868 = vadd.f32 %v830, 3.0
        %v869 = vadd.f32 %v835, 3.0
        %v870 = vmax.f32 %v838, 0.0
        %v871 = vmax.f32 %v839, 0.0
        %v872 = vmax.f32 %v840, 0.0
        %v873 = vmax.f32 %v841, 0.0
        %v874 = vmax.f32 %v842, 0.0
        %v875 = vmax.f32 %v843, 0.0
        %v876 = vmax.f32 %v844, 0.0
        %v877 = vmax.f32 %v845, 0.0
        %v878 = vmax.f32 %v846, 0.0
        %v879 = vmax.f32 %v847, 0.0
        %v880 = vmax.f32 %v848, 0.0
        %v881 = vmax.f32 %v849, 0.0
        %v882 = vmax.f32 %v850, 0.0
        %v883 = vmax.f32 %v851, 0.0
        %v884 = vmax.f32 %v852, 0.0
        %v885 = vmax.f32 %v853, 0.0
        %v886 = vmax.f32 %v854, 0.0
        %v887 = vmax.f32 %v855, 0.0
        %v888 = vmax.f32 %v856, 0.0
        %v889 = vmax.f32 %v857, 0.0
        %v890 = vmax.f32 %v858, 0.0
        %v891 = vmax.f32 %v859, 0.0
        %v892 = vmax.f32 %v860, 0.0
        %v893 = vmax.f32 %v861, 0.0
        %v894 = vmax.f32 %v862, 0.0
        %v895 = vmax.f32 %v863, 0.0
        %v896 = vmax.f32 %v864, 0.0
        %v897 = vmax.f32 %v865, 0.0
        %v898 = vmax.f32 %v866, 0.0
        %v899 = vmax.f32 %v867, 0.0
        %v900 = vmax.f32 %v868, 0.0
        %v901 = vmax.f32 %v869, 0.0
        %v902 = vmin.f32 %v870, 6.0
        %v903 = vmin.f32 %v871, 6.0
        %v904 = vmin.f32 %v872, 6.0
        %v905 = vmin.f32 %v873, 6.0
        %v906 = vmin.f32 %v874, 6.0
        %v907 = vmin.f32 %v875, 6.0
        %v908 = vmin.f32 %v876, 6.0
        %v909 = vmin.f32 %v877, 6.0
        %v910 = vmin.f32 %v878, 6.0
        %v911 = vmin.f32 %v879, 6.0
        %v912 = vmin.f32 %v880, 6.0
        %v913 = vmin.f32 %v881, 6.0
        %v914 = vmin.f32 %v882, 6.0
        %v915 = vmin.f32 %v883, 6.0
        %v916 = vmin.f32 %v884, 6.0
        %v917 = vmin.f32 %v885, 6.0
        %v918 = vmin.f32 %v886, 6.0
        %v919 = vmin.f32 %v887, 6.0
        %v920 = vmin.f32 %v888, 6.0
        %v921 = vmin.f32 %v889, 6.0
        %v922 = vmin.f32 %v890, 6.0
        %v923 = vmin.f32 %v891, 6.0
        %v924 = vmin.f32 %v892, 6.0
        %v925 = vmin.f32 %v893, 6.0
        %v926 = vmin.f32 %v894, 6.0
        %v927 = vmin.f32 %v895, 6.0
        %v928 = vmin.f32 %v896, 6.0
        %v929 = vmin.f32 %v897, 6.0
        %v930 = vmin.f32 %v898, 6.0
        %v931 = vmin.f32 %v899, 6.0
        %v932 = vmin.f32 %v900, 6.0
        %v933 = vmin.f32 %v901, 6.0
        %v934 = vmul.f32 %v902, 0.16666667
        %v935 = vmul.f32 %v903, 0.16666667
        %v936 = vmul.f32 %v904, 0.16666667
        %v937 = vmul.f32 %v905, 0.16666667
        %v938 = vmul.f32 %v906, 0.16666667
        %v939 = vmul.f32 %v907, 0.16666667
        %v940 = vmul.f32 %v908, 0.16666667
        %v941 = vmul.f32 %v909, 0.16666667
        %v942 = vmul.f32 %v910, 0.16666667
        %v943 = vmul.f32 %v911, 0.16666667
        %v944 = vmul.f32 %v912, 0.16666667
        %v945 = vmul.f32 %v913, 0.16666667
        %v946 = vmul.f32 %v914, 0.16666667
        %v947 = vmul.f32 %v915, 0.16666667
        %v948 = vmul.f32 %v916, 0.16666667
        %v949 = vmul.f32 %v917, 0.16666667
        %v950 = vmul.f32 %v918, 0.16666667
        %v951 = vmul.f32 %v919, 0.16666667
        %v952 = vmul.f32 %v920, 0.16666667
        %v953 = vmul.f32 %v921, 0.16666667
        %v954 = vmul.f32 %v922, 0.16666667
        %v955 = vmul.f32 %v923, 0.16666667
        %v956 = vmul.f32 %v924, 0.16666667
        %v957 = vmul.f32 %v925, 0.16666667
        %v958 = vmul.f32 %v926, 0.16666667
        %v959 = vmul.f32 %v927, 0.16666667
        %v960 = vmul.f32 %v928, 0.16666667
        %v961 = vmul.f32 %v929, 0.16666667
        %v962 = vmul.f32 %v930, 0.16666667
        %v963 = vmul.f32 %v931, 0.16666667
        %v964 = vmul.f32 %v932, 0.16666667
        %v965 = vmul.f32 %v933, 0.16666667
        %v966 = vmul.f32 %v680, %v934
        %v967 = vmul.f32 %v685, %v935
        %v968 = vmul.f32 %v690, %v936
        %v969 = vmul.f32 %v695, %v937
        %v970 = vmul.f32 %v700, %v938
        %v971 = vmul.f32 %v705, %v939
        %v972 = vmul.f32 %v710, %v940
        %v973 = vmul.f32 %v715, %v941
        %v974 = vmul.f32 %v720, %v942
        %v975 = vmul.f32 %v725, %v943
        %v976 = vmul.f32 %v730, %v944
        %v977 = vmul.f32 %v735, %v945
        %v978 = vmul.f32 %v740, %v946
        %v979 = vmul.f32 %v745, %v947
        %v980 = vmul.f32 %v750, %v948
        %v981 = vmul.f32 %v755, %v949
        %v982 = vmul.f32 %v760, %v950
        %v983 = vmul.f32 %v765, %v951
        %v984 = vmul.f32 %v770, %v952
        %v985 = vmul.f32 %v775, %v953
        %v986 = vmul.f32 %v780, %v954
        %v987 = vmul.f32 %v785, %v955
        %v988 = vmul.f32 %v790, %v956
        %v989 = vmul.f32 %v795, %v957
        %v990 = vmul.f32 %v800, %v958
        %v991 = vmul.f32 %v805, %v959
        %v992 = vmul.f32 %v810, %v960
        %v993 = vmul.f32 %v815, %v961
        %v994 = vmul.f32 %v820, %v962
        %v995 = vmul.f32 %v825, %v963
        %v996 = vmul.f32 %v830, %v964
        %v997 = vmul.f32 %v835, %v965
        %s998 = scalar_lea.vmem [#allocation2], 24
        %999 = vst [vmem:[%s998 + $0x1] sm:$0xff] %v966
        %1000 = vst [vmem:[%s998 + $0x9] sm:$0xff] %v967
        %1001 = vst [vmem:[%s998 + $0x19] sm:$0xff] %v968
        %1002 = vst [vmem:[%s998 + $0x21] sm:$0xff] %v969
        %1003 = vst [vmem:[%s998 + $0x31] sm:$0xff] %v970
        %1004 = vst [vmem:[%s998 + $0x39] sm:$0xff] %v971
        %1005 = vst [vmem:[%s998 + $0x49] sm:$0xff] %v972
        %1006 = vst [vmem:[%s998 + $0x51] sm:$0xff] %v973
        %1007 = vst [vmem:[%s998 + $0x61] sm:$0xff] %v974
        %1008 = vst [vmem:[%s998 + $0x69] sm:$0xff] %v975
        %1009 = vst [vmem:[%s998 + $0x79] sm:$0xff] %v976
        %1010 = vst [vmem:[%s998 + $0x81] sm:$0xff] %v977
        %1011 = vst [vmem:[%s998 + $0x91] sm:$0xff] %v978
        %1012 = vst [vmem:[%s998 + $0x99] sm:$0xff] %v979
        %1013 = vst [vmem:[%s998 + $0xa9] sm:$0xff] %v980
        %1014 = vst [vmem:[%s998 + $0xb1] sm:$0xff] %v981
        %1015 = vst [vmem:[%s998 + $0xc1] sm:$0xff] %v982
        %1016 = vst [vmem:[%s998 + $0xc9] sm:$0xff] %v983
        %1017 = vst [vmem:[%s998 + $0xd9] sm:$0xff] %v984
        %1018 = vst [vmem:[%s998 + $0xe1] sm:$0xff] %v985
        %1019 = vst [vmem:[%s998 + $0xf1] sm:$0xff] %v986
        %1020 = vst [vmem:[%s998 + $0xf9] sm:$0xff] %v987
        %1021 = vst [vmem:[%s998 + $0x109] sm:$0xff] %v988
        %1022 = vst [vmem:[%s998 + $0x111] sm:$0xff] %v989
        %1023 = vst [vmem:[%s998 + $0x121] sm:$0xff] %v990
        %1024 = vst [vmem:[%s998 + $0x129] sm:$0xff] %v991
        %1025 = vst [vmem:[%s998 + $0x139] sm:$0xff] %v992
        %1026 = vst [vmem:[%s998 + $0x141] sm:$0xff] %v993
        %1027 = vst [vmem:[%s998 + $0x151] sm:$0xff] %v994
        %1028 = vst [vmem:[%s998 + $0x159] sm:$0xff] %v995
        %1029 = vst [vmem:[%s998 + $0x169] sm:$0xff] %v996
        %1030 = vst [vmem:[%s998 + $0x171] sm:$0xff] %v997
        %v1031 = vld [vmem:[#allocation2] sm:$0xff]
        %v1032 = vld [vmem:[#allocation2 + $0x8] sm:$0xff]
        %v1033 = vld [vmem:[#allocation2 + $0x18] sm:$0xff]
        %v1034 = vld [vmem:[#allocation2 + $0x20] sm:$0xff]
        %v1035 = vld [vmem:[#allocation2 + $0x30] sm:$0xff]
        %v1036 = vld [vmem:[#allocation2 + $0x38] sm:$0xff]
        %v1037 = vld [vmem:[#allocation2 + $0x48] sm:$0xff]
        %v1038 = vld [vmem:[#allocation2 + $0x50] sm:$0xff]
        %v1039 = vld [vmem:[#allocation2 + $0x60] sm:$0xff]
        %v1040 = vld [vmem:[#allocation2 + $0x68] sm:$0xff]
        %v1041 = vld [vmem:[#allocation2 + $0x78] sm:$0xff]
        %v1042 = vld [vmem:[#allocation2 + $0x80] sm:$0xff]
        %v1043 = vld [vmem:[#allocation2 + $0x90] sm:$0xff]
        %v1044 = vld [vmem:[#allocation2 + $0x98] sm:$0xff]
        %v1045 = vld [vmem:[#allocation2 + $0xa8] sm:$0xff]
        %v1046 = vld [vmem:[#allocation2 + $0xb0] sm:$0xff]
        %v1047 = vld [vmem:[#allocation2 + $0xc0] sm:$0xff]
        %v1048 = vld [vmem:[#allocation2 + $0xc8] sm:$0xff]
        %v1049 = vld [vmem:[#allocation2 + $0xd8] sm:$0xff]
        %v1050 = vld [vmem:[#allocation2 + $0xe0] sm:$0xff]
        %v1051 = vld [vmem:[#allocation2 + $0xf0] sm:$0xff]
        %v1052 = vld [vmem:[#allocation2 + $0xf8] sm:$0xff]
        %v1053 = vld [vmem:[#allocation2 + $0x108] sm:$0xff]
        %v1054 = vld [vmem:[#allocation2 + $0x110] sm:$0xff]
        %v1055 = vld [vmem:[#allocation2 + $0x120] sm:$0xff]
        %v1056 = vld [vmem:[#allocation2 + $0x128] sm:$0xff]
        %v1057 = vld [vmem:[#allocation2 + $0x138] sm:$0xff]
        %v1058 = vld [vmem:[#allocation2 + $0x140] sm:$0xff]
        %v1059 = vld [vmem:[#allocation2 + $0x150] sm:$0xff]
        %v1060 = vld [vmem:[#allocation2 + $0x158] sm:$0xff]
        %v1061 = vld [vmem:[#allocation2 + $0x168] sm:$0xff]
        %v1062 = vld [vmem:[#allocation2 + $0x170] sm:$0xff]
        %v1063 = vld [vmem:[%s3] sm:$0x1]
        %v1064 = vlaneseq
        %v1065 = vshrl.u32 %v1064, 7
        %v1066 = vsub.s32 0, %v1065
        %v1067 = vrot.slane %v1063, %v1066
        %v1068 = vmul.f32 %v1031, %v1067
        %v1069 = vmul.f32 %v1032, %v1067
        %v1070 = vmul.f32 %v1033, %v1067
        %v1071 = vmul.f32 %v1034, %v1067
        %v1072 = vmul.f32 %v1035, %v1067
        %v1073 = vmul.f32 %v1036, %v1067
        %v1074 = vmul.f32 %v1037, %v1067
        %v1075 = vmul.f32 %v1038, %v1067
        %v1076 = vmul.f32 %v1039, %v1067
        %v1077 = vmul.f32 %v1040, %v1067
        %v1078 = vmul.f32 %v1041, %v1067
        %v1079 = vmul.f32 %v1042, %v1067
        %v1080 = vmul.f32 %v1043, %v1067
        %v1081 = vmul.f32 %v1044, %v1067
        %v1082 = vmul.f32 %v1045, %v1067
        %v1083 = vmul.f32 %v1046, %v1067
        %v1084 = vmul.f32 %v1047, %v1067
        %v1085 = vmul.f32 %v1048, %v1067
        %v1086 = vmul.f32 %v1049, %v1067
        %v1087 = vmul.f32 %v1050, %v1067
        %v1088 = vmul.f32 %v1051, %v1067
        %v1089 = vmul.f32 %v1052, %v1067
        %v1090 = vmul.f32 %v1053, %v1067
        %v1091 = vmul.f32 %v1054, %v1067
        %v1092 = vmul.f32 %v1055, %v1067
        %v1093 = vmul.f32 %v1056, %v1067
        %v1094 = vmul.f32 %v1057, %v1067
        %v1095 = vmul.f32 %v1058, %v1067
        %v1096 = vmul.f32 %v1059, %v1067
        %v1097 = vmul.f32 %v1060, %v1067
        %v1098 = vmul.f32 %v1061, %v1067
        %v1099 = vmul.f32 %v1062, %v1067
        %v1100 = vadd.f32 %v1068, 0.0
        %v1101 = vadd.f32 %v1069, 0.0
        %v1102 = vadd.f32 %v1070, 0.0
        %v1103 = vadd.f32 %v1071, 0.0
        %v1104 = vadd.f32 %v1072, 0.0
        %v1105 = vadd.f32 %v1073, 0.0
        %v1106 = vadd.f32 %v1074, 0.0
        %v1107 = vadd.f32 %v1075, 0.0
        %v1108 = vadd.f32 %v1076, 0.0
        %v1109 = vadd.f32 %v1077, 0.0
        %v1110 = vadd.f32 %v1078, 0.0
        %v1111 = vadd.f32 %v1079, 0.0
        %v1112 = vadd.f32 %v1080, 0.0
        %v1113 = vadd.f32 %v1081, 0.0
        %v1114 = vadd.f32 %v1082, 0.0
        %v1115 = vadd.f32 %v1083, 0.0
        %v1116 = vadd.f32 %v1084, 0.0
        %v1117 = vadd.f32 %v1085, 0.0
        %v1118 = vadd.f32 %v1086, 0.0
        %v1119 = vadd.f32 %v1087, 0.0
        %v1120 = vadd.f32 %v1088, 0.0
        %v1121 = vadd.f32 %v1089, 0.0
        %v1122 = vadd.f32 %v1090, 0.0
        %v1123 = vadd.f32 %v1091, 0.0
        %v1124 = vadd.f32 %v1092, 0.0
        %v1125 = vadd.f32 %v1093, 0.0
        %v1126 = vadd.f32 %v1094, 0.0
        %v1127 = vadd.f32 %v1095, 0.0
        %v1128 = vadd.f32 %v1096, 0.0
        %v1129 = vadd.f32 %v1097, 0.0
        %v1130 = vadd.f32 %v1098, 0.0
        %v1131 = vadd.f32 %v1099, 0.0
        %v1132 = vld [vmem:[#allocation2 + $0x1] sm:$0xff]
        %v1133 = vld [vmem:[#allocation2 + $0x9] sm:$0xff]
        %v1134 = vld [vmem:[#allocation2 + $0x19] sm:$0xff]
        %v1135 = vld [vmem:[#allocation2 + $0x21] sm:$0xff]
        %v1136 = vld [vmem:[#allocation2 + $0x31] sm:$0xff]
        %v1137 = vld [vmem:[#allocation2 + $0x39] sm:$0xff]
        %v1138 = vld [vmem:[#allocation2 + $0x49] sm:$0xff]
        %v1139 = vld [vmem:[#allocation2 + $0x51] sm:$0xff]
        %v1140 = vld [vmem:[#allocation2 + $0x61] sm:$0xff]
        %v1141 = vld [vmem:[#allocation2 + $0x69] sm:$0xff]
        %v1142 = vld [vmem:[#allocation2 + $0x79] sm:$0xff]
        %v1143 = vld [vmem:[#allocation2 + $0x81] sm:$0xff]
        %v1144 = vld [vmem:[#allocation2 + $0x91] sm:$0xff]
        %v1145 = vld [vmem:[#allocation2 + $0x99] sm:$0xff]
        %v1146 = vld [vmem:[#allocation2 + $0xa9] sm:$0xff]
        %v1147 = vld [vmem:[#allocation2 + $0xb1] sm:$0xff]
        %v1148 = vld [vmem:[#allocation2 + $0xc1] sm:$0xff]
        %v1149 = vld [vmem:[#allocation2 + $0xc9] sm:$0xff]
        %v1150 = vld [vmem:[#allocation2 + $0xd9] sm:$0xff]
        %v1151 = vld [vmem:[#allocation2 + $0xe1] sm:$0xff]
        %v1152 = vld [vmem:[#allocation2 + $0xf1] sm:$0xff]
        %v1153 = vld [vmem:[#allocation2 + $0xf9] sm:$0xff]
        %v1154 = vld [vmem:[#allocation2 + $0x109] sm:$0xff]
        %v1155 = vld [vmem:[#allocation2 + $0x111] sm:$0xff]
        %v1156 = vld [vmem:[#allocation2 + $0x121] sm:$0xff]
        %v1157 = vld [vmem:[#allocation2 + $0x129] sm:$0xff]
        %v1158 = vld [vmem:[#allocation2 + $0x139] sm:$0xff]
        %v1159 = vld [vmem:[#allocation2 + $0x141] sm:$0xff]
        %v1160 = vld [vmem:[#allocation2 + $0x151] sm:$0xff]
        %v1161 = vld [vmem:[#allocation2 + $0x159] sm:$0xff]
        %v1162 = vld [vmem:[#allocation2 + $0x169] sm:$0xff]
        %v1163 = vld [vmem:[#allocation2 + $0x171] sm:$0xff]
        %v1164 = vld [vmem:[%s3 + $0x1] sm:$0x1]
        %v1165 = vlaneseq
        %v1166 = vshrl.u32 %v1165, 7
        %v1167 = vsub.s32 0, %v1166
        %v1168 = vrot.slane %v1164, %v1167
        %v1169 = vmul.f32 %v1132, %v1168
        %v1170 = vmul.f32 %v1133, %v1168
        %v1171 = vmul.f32 %v1134, %v1168
        %v1172 = vmul.f32 %v1135, %v1168
        %v1173 = vmul.f32 %v1136, %v1168
        %v1174 = vmul.f32 %v1137, %v1168
        %v1175 = vmul.f32 %v1138, %v1168
        %v1176 = vmul.f32 %v1139, %v1168
        %v1177 = vmul.f32 %v1140, %v1168
        %v1178 = vmul.f32 %v1141, %v1168
        %v1179 = vmul.f32 %v1142, %v1168
        %v1180 = vmul.f32 %v1143, %v1168
        %v1181 = vmul.f32 %v1144, %v1168
        %v1182 = vmul.f32 %v1145, %v1168
        %v1183 = vmul.f32 %v1146, %v1168
        %v1184 = vmul.f32 %v1147, %v1168
        %v1185 = vmul.f32 %v1148, %v1168
        %v1186 = vmul.f32 %v1149, %v1168
        %v1187 = vmul.f32 %v1150, %v1168
        %v1188 = vmul.f32 %v1151, %v1168
        %v1189 = vmul.f32 %v1152, %v1168
        %v1190 = vmul.f32 %v1153, %v1168
        %v1191 = vmul.f32 %v1154, %v1168
        %v1192 = vmul.f32 %v1155, %v1168
        %v1193 = vmul.f32 %v1156, %v1168
        %v1194 = vmul.f32 %v1157, %v1168
        %v1195 = vmul.f32 %v1158, %v1168
        %v1196 = vmul.f32 %v1159, %v1168
        %v1197 = vmul.f32 %v1160, %v1168
        %v1198 = vmul.f32 %v1161, %v1168
        %v1199 = vmul.f32 %v1162, %v1168
        %v1200 = vmul.f32 %v1163, %v1168
        %v1201 = vadd.f32 %v1100, %v1169
        %v1202 = vadd.f32 %v1101, %v1170
        %v1203 = vadd.f32 %v1102, %v1171
        %v1204 = vadd.f32 %v1103, %v1172
        %v1205 = vadd.f32 %v1104, %v1173
        %v1206 = vadd.f32 %v1105, %v1174
        %v1207 = vadd.f32 %v1106, %v1175
        %v1208 = vadd.f32 %v1107, %v1176
        %v1209 = vadd.f32 %v1108, %v1177
        %v1210 = vadd.f32 %v1109, %v1178
        %v1211 = vadd.f32 %v1110, %v1179
        %v1212 = vadd.f32 %v1111, %v1180
        %v1213 = vadd.f32 %v1112, %v1181
        %v1214 = vadd.f32 %v1113, %v1182
        %v1215 = vadd.f32 %v1114, %v1183
        %v1216 = vadd.f32 %v1115, %v1184
        %v1217 = vadd.f32 %v1116, %v1185
        %v1218 = vadd.f32 %v1117, %v1186
        %v1219 = vadd.f32 %v1118, %v1187
        %v1220 = vadd.f32 %v1119, %v1188
        %v1221 = vadd.f32 %v1120, %v1189
        %v1222 = vadd.f32 %v1121, %v1190
        %v1223 = vadd.f32 %v1122, %v1191
        %v1224 = vadd.f32 %v1123, %v1192
        %v1225 = vadd.f32 %v1124, %v1193
        %v1226 = vadd.f32 %v1125, %v1194
        %v1227 = vadd.f32 %v1126, %v1195
        %v1228 = vadd.f32 %v1127, %v1196
        %v1229 = vadd.f32 %v1128, %v1197
        %v1230 = vadd.f32 %v1129, %v1198
        %v1231 = vadd.f32 %v1130, %v1199
        %v1232 = vadd.f32 %v1131, %v1200
        %v1233 = vld [vmem:[#allocation2 + $0x2] sm:$0xff]
        %v1234 = vld [vmem:[#allocation2 + $0xa] sm:$0xff]
        %v1235 = vld [vmem:[#allocation2 + $0x1a] sm:$0xff]
        %v1236 = vld [vmem:[#allocation2 + $0x22] sm:$0xff]
        %v1237 = vld [vmem:[#allocation2 + $0x32] sm:$0xff]
        %v1238 = vld [vmem:[#allocation2 + $0x3a] sm:$0xff]
        %v1239 = vld [vmem:[#allocation2 + $0x4a] sm:$0xff]
        %v1240 = vld [vmem:[#allocation2 + $0x52] sm:$0xff]
        %v1241 = vld [vmem:[#allocation2 + $0x62] sm:$0xff]
        %v1242 = vld [vmem:[#allocation2 + $0x6a] sm:$0xff]
        %v1243 = vld [vmem:[#allocation2 + $0x7a] sm:$0xff]
        %v1244 = vld [vmem:[#allocation2 + $0x82] sm:$0xff]
        %v1245 = vld [vmem:[#allocation2 + $0x92] sm:$0xff]
        %v1246 = vld [vmem:[#allocation2 + $0x9a] sm:$0xff]
        %v1247 = vld [vmem:[#allocation2 + $0xaa] sm:$0xff]
        %v1248 = vld [vmem:[#allocation2 + $0xb2] sm:$0xff]
        %v1249 = vld [vmem:[#allocation2 + $0xc2] sm:$0xff]
        %v1250 = vld [vmem:[#allocation2 + $0xca] sm:$0xff]
        %v1251 = vld [vmem:[#allocation2 + $0xda] sm:$0xff]
        %v1252 = vld [vmem:[#allocation2 + $0xe2] sm:$0xff]
        %v1253 = vld [vmem:[#allocation2 + $0xf2] sm:$0xff]
        %v1254 = vld [vmem:[#allocation2 + $0xfa] sm:$0xff]
        %v1255 = vld [vmem:[#allocation2 + $0x10a] sm:$0xff]
        %v1256 = vld [vmem:[#allocation2 + $0x112] sm:$0xff]
        %v1257 = vld [vmem:[#allocation2 + $0x122] sm:$0xff]
        %v1258 = vld [vmem:[#allocation2 + $0x12a] sm:$0xff]
        %v1259 = vld [vmem:[#allocation2 + $0x13a] sm:$0xff]
        %v1260 = vld [vmem:[#allocation2 + $0x142] sm:$0xff]
        %v1261 = vld [vmem:[#allocation2 + $0x152] sm:$0xff]
        %v1262 = vld [vmem:[#allocation2 + $0x15a] sm:$0xff]
        %v1263 = vld [vmem:[#allocation2 + $0x16a] sm:$0xff]
        %v1264 = vld [vmem:[#allocation2 + $0x172] sm:$0xff]
        %v1265 = vld [vmem:[%s3 + $0x2] sm:$0x1]
        %v1266 = vlaneseq
        %v1267 = vshrl.u32 %v1266, 7
        %v1268 = vsub.s32 0, %v1267
        %v1269 = vrot.slane %v1265, %v1268
        %v1270 = vmul.f32 %v1233, %v1269
        %v1271 = vmul.f32 %v1234, %v1269
        %v1272 = vmul.f32 %v1235, %v1269
        %v1273 = vmul.f32 %v1236, %v1269
        %v1274 = vmul.f32 %v1237, %v1269
        %v1275 = vmul.f32 %v1238, %v1269
        %v1276 = vmul.f32 %v1239, %v1269
        %v1277 = vmul.f32 %v1240, %v1269
        %v1278 = vmul.f32 %v1241, %v1269
        %v1279 = vmul.f32 %v1242, %v1269
        %v1280 = vmul.f32 %v1243, %v1269
        %v1281 = vmul.f32 %v1244, %v1269
        %v1282 = vmul.f32 %v1245, %v1269
        %v1283 = vmul.f32 %v1246, %v1269
        %v1284 = vmul.f32 %v1247, %v1269
        %v1285 = vmul.f32 %v1248, %v1269
        %v1286 = vmul.f32 %v1249, %v1269
        %v1287 = vmul.f32 %v1250, %v1269
        %v1288 = vmul.f32 %v1251, %v1269
        %v1289 = vmul.f32 %v1252, %v1269
        %v1290 = vmul.f32 %v1253, %v1269
        %v1291 = vmul.f32 %v1254, %v1269
        %v1292 = vmul.f32 %v1255, %v1269
        %v1293 = vmul.f32 %v1256, %v1269
        %v1294 = vmul.f32 %v1257, %v1269
        %v1295 = vmul.f32 %v1258, %v1269
        %v1296 = vmul.f32 %v1259, %v1269
        %v1297 = vmul.f32 %v1260, %v1269
        %v1298 = vmul.f32 %v1261, %v1269
        %v1299 = vmul.f32 %v1262, %v1269
        %v1300 = vmul.f32 %v1263, %v1269
        %v1301 = vmul.f32 %v1264, %v1269
        %v1302 = vadd.f32 %v1201, %v1270
        %v1303 = vadd.f32 %v1202, %v1271
        %v1304 = vadd.f32 %v1203, %v1272
        %v1305 = vadd.f32 %v1204, %v1273
        %v1306 = vadd.f32 %v1205, %v1274
        %v1307 = vadd.f32 %v1206, %v1275
        %v1308 = vadd.f32 %v1207, %v1276
        %v1309 = vadd.f32 %v1208, %v1277
        %v1310 = vadd.f32 %v1209, %v1278
        %v1311 = vadd.f32 %v1210, %v1279
        %v1312 = vadd.f32 %v1211, %v1280
        %v1313 = vadd.f32 %v1212, %v1281
        %v1314 = vadd.f32 %v1213, %v1282
        %v1315 = vadd.f32 %v1214, %v1283
        %v1316 = vadd.f32 %v1215, %v1284
        %v1317 = vadd.f32 %v1216, %v1285
        %v1318 = vadd.f32 %v1217, %v1286
        %v1319 = vadd.f32 %v1218, %v1287
        %v1320 = vadd.f32 %v1219, %v1288
        %v1321 = vadd.f32 %v1220, %v1289
        %v1322 = vadd.f32 %v1221, %v1290
        %v1323 = vadd.f32 %v1222, %v1291
        %v1324 = vadd.f32 %v1223, %v1292
        %v1325 = vadd.f32 %v1224, %v1293
        %v1326 = vadd.f32 %v1225, %v1294
        %v1327 = vadd.f32 %v1226, %v1295
        %v1328 = vadd.f32 %v1227, %v1296
        %v1329 = vadd.f32 %v1228, %v1297
        %v1330 = vadd.f32 %v1229, %v1298
        %v1331 = vadd.f32 %v1230, %v1299
        %v1332 = vadd.f32 %v1231, %v1300
        %v1333 = vadd.f32 %v1232, %v1301
        %v1334 = vld [vmem:[%s998] sm:$0xff]
        %v1335 = vld [vmem:[%s998 + $0x8] sm:$0xff]
        %v1336 = vld [vmem:[%s998 + $0x18] sm:$0xff]
        %v1337 = vld [vmem:[%s998 + $0x20] sm:$0xff]
        %v1338 = vld [vmem:[%s998 + $0x30] sm:$0xff]
        %v1339 = vld [vmem:[%s998 + $0x38] sm:$0xff]
        %v1340 = vld [vmem:[%s998 + $0x48] sm:$0xff]
        %v1341 = vld [vmem:[%s998 + $0x50] sm:$0xff]
        %v1342 = vld [vmem:[%s998 + $0x60] sm:$0xff]
        %v1343 = vld [vmem:[%s998 + $0x68] sm:$0xff]
        %v1344 = vld [vmem:[%s998 + $0x78] sm:$0xff]
        %v1345 = vld [vmem:[%s998 + $0x80] sm:$0xff]
        %v1346 = vld [vmem:[%s998 + $0x90] sm:$0xff]
        %v1347 = vld [vmem:[%s998 + $0x98] sm:$0xff]
        %v1348 = vld [vmem:[%s998 + $0xa8] sm:$0xff]
        %v1349 = vld [vmem:[%s998 + $0xb0] sm:$0xff]
        %v1350 = vld [vmem:[%s998 + $0xc0] sm:$0xff]
        %v1351 = vld [vmem:[%s998 + $0xc8] sm:$0xff]
        %v1352 = vld [vmem:[%s998 + $0xd8] sm:$0xff]
        %v1353 = vld [vmem:[%s998 + $0xe0] sm:$0xff]
        %v1354 = vld [vmem:[%s998 + $0xf0] sm:$0xff]
        %v1355 = vld [vmem:[%s998 + $0xf8] sm:$0xff]
        %v1356 = vld [vmem:[%s998 + $0x108] sm:$0xff]
        %v1357 = vld [vmem:[%s998 + $0x110] sm:$0xff]
        %v1358 = vld [vmem:[%s998 + $0x120] sm:$0xff]
        %v1359 = vld [vmem:[%s998 + $0x128] sm:$0xff]
        %v1360 = vld [vmem:[%s998 + $0x138] sm:$0xff]
        %v1361 = vld [vmem:[%s998 + $0x140] sm:$0xff]
        %v1362 = vld [vmem:[%s998 + $0x150] sm:$0xff]
        %v1363 = vld [vmem:[%s998 + $0x158] sm:$0xff]
        %v1364 = vld [vmem:[%s998 + $0x168] sm:$0xff]
        %v1365 = vld [vmem:[%s998 + $0x170] sm:$0xff]
        %v1366 = vld [vmem:[%s3 + $0x3] sm:$0x1]
        %v1367 = vlaneseq
        %v1368 = vshrl.u32 %v1367, 7
        %v1369 = vsub.s32 0, %v1368
        %v1370 = vrot.slane %v1366, %v1369
        %v1371 = vmul.f32 %v1334, %v1370
        %v1372 = vmul.f32 %v1335, %v1370
        %v1373 = vmul.f32 %v1336, %v1370
        %v1374 = vmul.f32 %v1337, %v1370
        %v1375 = vmul.f32 %v1338, %v1370
        %v1376 = vmul.f32 %v1339, %v1370
        %v1377 = vmul.f32 %v1340, %v1370
        %v1378 = vmul.f32 %v1341, %v1370
        %v1379 = vmul.f32 %v1342, %v1370
        %v1380 = vmul.f32 %v1343, %v1370
        %v1381 = vmul.f32 %v1344, %v1370
        %v1382 = vmul.f32 %v1345, %v1370
        %v1383 = vmul.f32 %v1346, %v1370
        %v1384 = vmul.f32 %v1347, %v1370
        %v1385 = vmul.f32 %v1348, %v1370
        %v1386 = vmul.f32 %v1349, %v1370
        %v1387 = vmul.f32 %v1350, %v1370
        %v1388 = vmul.f32 %v1351, %v1370
        %v1389 = vmul.f32 %v1352, %v1370
        %v1390 = vmul.f32 %v1353, %v1370
        %v1391 = vmul.f32 %v1354, %v1370
        %v1392 = vmul.f32 %v1355, %v1370
        %v1393 = vmul.f32 %v1356, %v1370
        %v1394 = vmul.f32 %v1357, %v1370
        %v1395 = vmul.f32 %v1358, %v1370
        %v1396 = vmul.f32 %v1359, %v1370
        %v1397 = vmul.f32 %v1360, %v1370
        %v1398 = vmul.f32 %v1361, %v1370
        %v1399 = vmul.f32 %v1362, %v1370
        %v1400 = vmul.f32 %v1363, %v1370
        %v1401 = vmul.f32 %v1364, %v1370
        %v1402 = vmul.f32 %v1365, %v1370
        %v1403 = vadd.f32 %v1302, %v1371
        %v1404 = vadd.f32 %v1303, %v1372
        %v1405 = vadd.f32 %v1304, %v1373
        %v1406 = vadd.f32 %v1305, %v1374
        %v1407 = vadd.f32 %v1306, %v1375
        %v1408 = vadd.f32 %v1307, %v1376
        %v1409 = vadd.f32 %v1308, %v1377
        %v1410 = vadd.f32 %v1309, %v1378
        %v1411 = vadd.f32 %v1310, %v1379
        %v1412 = vadd.f32 %v1311, %v1380
        %v1413 = vadd.f32 %v1312, %v1381
        %v1414 = vadd.f32 %v1313, %v1382
        %v1415 = vadd.f32 %v1314, %v1383
        %v1416 = vadd.f32 %v1315, %v1384
        %v1417 = vadd.f32 %v1316, %v1385
        %v1418 = vadd.f32 %v1317, %v1386
        %v1419 = vadd.f32 %v1318, %v1387
        %v1420 = vadd.f32 %v1319, %v1388
        %v1421 = vadd.f32 %v1320, %v1389
        %v1422 = vadd.f32 %v1321, %v1390
        %v1423 = vadd.f32 %v1322, %v1391
        %v1424 = vadd.f32 %v1323, %v1392
        %v1425 = vadd.f32 %v1324, %v1393
        %v1426 = vadd.f32 %v1325, %v1394
        %v1427 = vadd.f32 %v1326, %v1395
        %v1428 = vadd.f32 %v1327, %v1396
        %v1429 = vadd.f32 %v1328, %v1397
        %v1430 = vadd.f32 %v1329, %v1398
        %v1431 = vadd.f32 %v1330, %v1399
        %v1432 = vadd.f32 %v1331, %v1400
        %v1433 = vadd.f32 %v1332, %v1401
        %v1434 = vadd.f32 %v1333, %v1402
        %v1435 = vld [vmem:[%s998 + $0x1] sm:$0xff]
        %v1436 = vld [vmem:[%s998 + $0x9] sm:$0xff]
        %v1437 = vld [vmem:[%s998 + $0x19] sm:$0xff]
        %v1438 = vld [vmem:[%s998 + $0x21] sm:$0xff]
        %v1439 = vld [vmem:[%s998 + $0x31] sm:$0xff]
        %v1440 = vld [vmem:[%s998 + $0x39] sm:$0xff]
        %v1441 = vld [vmem:[%s998 + $0x49] sm:$0xff]
        %v1442 = vld [vmem:[%s998 + $0x51] sm:$0xff]
        %v1443 = vld [vmem:[%s998 + $0x61] sm:$0xff]
        %v1444 = vld [vmem:[%s998 + $0x69] sm:$0xff]
        %v1445 = vld [vmem:[%s998 + $0x79] sm:$0xff]
        %v1446 = vld [vmem:[%s998 + $0x81] sm:$0xff]
        %v1447 = vld [vmem:[%s998 + $0x91] sm:$0xff]
        %v1448 = vld [vmem:[%s998 + $0x99] sm:$0xff]
        %v1449 = vld [vmem:[%s998 + $0xa9] sm:$0xff]
        %v1450 = vld [vmem:[%s998 + $0xb1] sm:$0xff]
        %v1451 = vld [vmem:[%s998 + $0xc1] sm:$0xff]
        %v1452 = vld [vmem:[%s998 + $0xc9] sm:$0xff]
        %v1453 = vld [vmem:[%s998 + $0xd9] sm:$0xff]
        %v1454 = vld [vmem:[%s998 + $0xe1] sm:$0xff]
        %v1455 = vld [vmem:[%s998 + $0xf1] sm:$0xff]
        %v1456 = vld [vmem:[%s998 + $0xf9] sm:$0xff]
        %v1457 = vld [vmem:[%s998 + $0x109] sm:$0xff]
        %v1458 = vld [vmem:[%s998 + $0x111] sm:$0xff]
        %v1459 = vld [vmem:[%s998 + $0x121] sm:$0xff]
        %v1460 = vld [vmem:[%s998 + $0x129] sm:$0xff]
        %v1461 = vld [vmem:[%s998 + $0x139] sm:$0xff]
        %v1462 = vld [vmem:[%s998 + $0x141] sm:$0xff]
        %v1463 = vld [vmem:[%s998 + $0x151] sm:$0xff]
        %v1464 = vld [vmem:[%s998 + $0x159] sm:$0xff]
        %v1465 = vld [vmem:[%s998 + $0x169] sm:$0xff]
        %v1466 = vld [vmem:[%s998 + $0x171] sm:$0xff]
        %v1467 = vld [vmem:[%s3 + $0x4] sm:$0x1]
        %v1468 = vlaneseq
        %v1469 = vshrl.u32 %v1468, 7
        %v1470 = vsub.s32 0, %v1469
        %v1471 = vrot.slane %v1467, %v1470
        %v1472 = vmul.f32 %v1435, %v1471
        %v1473 = vmul.f32 %v1436, %v1471
        %v1474 = vmul.f32 %v1437, %v1471
        %v1475 = vmul.f32 %v1438, %v1471
        %v1476 = vmul.f32 %v1439, %v1471
        %v1477 = vmul.f32 %v1440, %v1471
        %v1478 = vmul.f32 %v1441, %v1471
        %v1479 = vmul.f32 %v1442, %v1471
        %v1480 = vmul.f32 %v1443, %v1471
        %v1481 = vmul.f32 %v1444, %v1471
        %v1482 = vmul.f32 %v1445, %v1471
        %v1483 = vmul.f32 %v1446, %v1471
        %v1484 = vmul.f32 %v1447, %v1471
        %v1485 = vmul.f32 %v1448, %v1471
        %v1486 = vmul.f32 %v1449, %v1471
        %v1487 = vmul.f32 %v1450, %v1471
        %v1488 = vmul.f32 %v1451, %v1471
        %v1489 = vmul.f32 %v1452, %v1471
        %v1490 = vmul.f32 %v1453, %v1471
        %v1491 = vmul.f32 %v1454, %v1471
        %v1492 = vmul.f32 %v1455, %v1471
        %v1493 = vmul.f32 %v1456, %v1471
        %v1494 = vmul.f32 %v1457, %v1471
        %v1495 = vmul.f32 %v1458, %v1471
        %v1496 = vmul.f32 %v1459, %v1471
        %v1497 = vmul.f32 %v1460, %v1471
        %v1498 = vmul.f32 %v1461, %v1471
        %v1499 = vmul.f32 %v1462, %v1471
        %v1500 = vmul.f32 %v1463, %v1471
        %v1501 = vmul.f32 %v1464, %v1471
        %v1502 = vmul.f32 %v1465, %v1471
        %v1503 = vmul.f32 %v1466, %v1471
        %v1504 = vadd.f32 %v1403, %v1472
        %v1505 = vadd.f32 %v1404, %v1473
        %v1506 = vadd.f32 %v1405, %v1474
        %v1507 = vadd.f32 %v1406, %v1475
        %v1508 = vadd.f32 %v1407, %v1476
        %v1509 = vadd.f32 %v1408, %v1477
        %v1510 = vadd.f32 %v1409, %v1478
        %v1511 = vadd.f32 %v1410, %v1479
        %v1512 = vadd.f32 %v1411, %v1480
        %v1513 = vadd.f32 %v1412, %v1481
        %v1514 = vadd.f32 %v1413, %v1482
        %v1515 = vadd.f32 %v1414, %v1483
        %v1516 = vadd.f32 %v1415, %v1484
        %v1517 = vadd.f32 %v1416, %v1485
        %v1518 = vadd.f32 %v1417, %v1486
        %v1519 = vadd.f32 %v1418, %v1487
        %v1520 = vadd.f32 %v1419, %v1488
        %v1521 = vadd.f32 %v1420, %v1489
        %v1522 = vadd.f32 %v1421, %v1490
        %v1523 = vadd.f32 %v1422, %v1491
        %v1524 = vadd.f32 %v1423, %v1492
        %v1525 = vadd.f32 %v1424, %v1493
        %v1526 = vadd.f32 %v1425, %v1494
        %v1527 = vadd.f32 %v1426, %v1495
        %v1528 = vadd.f32 %v1427, %v1496
        %v1529 = vadd.f32 %v1428, %v1497
        %v1530 = vadd.f32 %v1429, %v1498
        %v1531 = vadd.f32 %v1430, %v1499
        %v1532 = vadd.f32 %v1431, %v1500
        %v1533 = vadd.f32 %v1432, %v1501
        %v1534 = vadd.f32 %v1433, %v1502
        %v1535 = vadd.f32 %v1434, %v1503
        %v1536 = vld [vmem:[%s998 + $0x2] sm:$0xff]
        %v1537 = vld [vmem:[%s998 + $0xa] sm:$0xff]
        %v1538 = vld [vmem:[%s998 + $0x1a] sm:$0xff]
        %v1539 = vld [vmem:[%s998 + $0x22] sm:$0xff]
        %v1540 = vld [vmem:[%s998 + $0x32] sm:$0xff]
        %v1541 = vld [vmem:[%s998 + $0x3a] sm:$0xff]
        %v1542 = vld [vmem:[%s998 + $0x4a] sm:$0xff]
        %v1543 = vld [vmem:[%s998 + $0x52] sm:$0xff]
        %v1544 = vld [vmem:[%s998 + $0x62] sm:$0xff]
        %v1545 = vld [vmem:[%s998 + $0x6a] sm:$0xff]
        %v1546 = vld [vmem:[%s998 + $0x7a] sm:$0xff]
        %v1547 = vld [vmem:[%s998 + $0x82] sm:$0xff]
        %v1548 = vld [vmem:[%s998 + $0x92] sm:$0xff]
        %v1549 = vld [vmem:[%s998 + $0x9a] sm:$0xff]
        %v1550 = vld [vmem:[%s998 + $0xaa] sm:$0xff]
        %v1551 = vld [vmem:[%s998 + $0xb2] sm:$0xff]
        %v1552 = vld [vmem:[%s998 + $0xc2] sm:$0xff]
        %v1553 = vld [vmem:[%s998 + $0xca] sm:$0xff]
        %v1554 = vld [vmem:[%s998 + $0xda] sm:$0xff]
        %v1555 = vld [vmem:[%s998 + $0xe2] sm:$0xff]
        %v1556 = vld [vmem:[%s998 + $0xf2] sm:$0xff]
        %v1557 = vld [vmem:[%s998 + $0xfa] sm:$0xff]
        %v1558 = vld [vmem:[%s998 + $0x10a] sm:$0xff]
        %v1559 = vld [vmem:[%s998 + $0x112] sm:$0xff]
        %v1560 = vld [vmem:[%s998 + $0x122] sm:$0xff]
        %v1561 = vld [vmem:[%s998 + $0x12a] sm:$0xff]
        %v1562 = vld [vmem:[%s998 + $0x13a] sm:$0xff]
        %v1563 = vld [vmem:[%s998 + $0x142] sm:$0xff]
        %v1564 = vld [vmem:[%s998 + $0x152] sm:$0xff]
        %v1565 = vld [vmem:[%s998 + $0x15a] sm:$0xff]
        %v1566 = vld [vmem:[%s998 + $0x16a] sm:$0xff]
        %v1567 = vld [vmem:[%s998 + $0x172] sm:$0xff]
        %v1568 = vld [vmem:[%s3 + $0x5] sm:$0x1]
        %v1569 = vlaneseq
        %v1570 = vshrl.u32 %v1569, 7
        %v1571 = vsub.s32 0, %v1570
        %v1572 = vrot.slane %v1568, %v1571
        %v1573 = vmul.f32 %v1536, %v1572
        %v1574 = vmul.f32 %v1537, %v1572
        %v1575 = vmul.f32 %v1538, %v1572
        %v1576 = vmul.f32 %v1539, %v1572
        %v1577 = vmul.f32 %v1540, %v1572
        %v1578 = vmul.f32 %v1541, %v1572
        %v1579 = vmul.f32 %v1542, %v1572
        %v1580 = vmul.f32 %v1543, %v1572
        %v1581 = vmul.f32 %v1544, %v1572
        %v1582 = vmul.f32 %v1545, %v1572
        %v1583 = vmul.f32 %v1546, %v1572
        %v1584 = vmul.f32 %v1547, %v1572
        %v1585 = vmul.f32 %v1548, %v1572
        %v1586 = vmul.f32 %v1549, %v1572
        %v1587 = vmul.f32 %v1550, %v1572
        %v1588 = vmul.f32 %v1551, %v1572
        %v1589 = vmul.f32 %v1552, %v1572
        %v1590 = vmul.f32 %v1553, %v1572
        %v1591 = vmul.f32 %v1554, %v1572
        %v1592 = vmul.f32 %v1555, %v1572
        %v1593 = vmul.f32 %v1556, %v1572
        %v1594 = vmul.f32 %v1557, %v1572
        %v1595 = vmul.f32 %v1558, %v1572
        %v1596 = vmul.f32 %v1559, %v1572
        %v1597 = vmul.f32 %v1560, %v1572
        %v1598 = vmul.f32 %v1561, %v1572
        %v1599 = vmul.f32 %v1562, %v1572
        %v1600 = vmul.f32 %v1563, %v1572
        %v1601 = vmul.f32 %v1564, %v1572
        %v1602 = vmul.f32 %v1565, %v1572
        %v1603 = vmul.f32 %v1566, %v1572
        %v1604 = vmul.f32 %v1567, %v1572
        %v1605 = vadd.f32 %v1504, %v1573
        %v1606 = vadd.f32 %v1505, %v1574
        %v1607 = vadd.f32 %v1506, %v1575
        %v1608 = vadd.f32 %v1507, %v1576
        %v1609 = vadd.f32 %v1508, %v1577
        %v1610 = vadd.f32 %v1509, %v1578
        %v1611 = vadd.f32 %v1510, %v1579
        %v1612 = vadd.f32 %v1511, %v1580
        %v1613 = vadd.f32 %v1512, %v1581
        %v1614 = vadd.f32 %v1513, %v1582
        %v1615 = vadd.f32 %v1514, %v1583
        %v1616 = vadd.f32 %v1515, %v1584
        %v1617 = vadd.f32 %v1516, %v1585
        %v1618 = vadd.f32 %v1517, %v1586
        %v1619 = vadd.f32 %v1518, %v1587
        %v1620 = vadd.f32 %v1519, %v1588
        %v1621 = vadd.f32 %v1520, %v1589
        %v1622 = vadd.f32 %v1521, %v1590
        %v1623 = vadd.f32 %v1522, %v1591
        %v1624 = vadd.f32 %v1523, %v1592
        %v1625 = vadd.f32 %v1524, %v1593
        %v1626 = vadd.f32 %v1525, %v1594
        %v1627 = vadd.f32 %v1526, %v1595
        %v1628 = vadd.f32 %v1527, %v1596
        %v1629 = vadd.f32 %v1528, %v1597
        %v1630 = vadd.f32 %v1529, %v1598
        %v1631 = vadd.f32 %v1530, %v1599
        %v1632 = vadd.f32 %v1531, %v1600
        %v1633 = vadd.f32 %v1532, %v1601
        %v1634 = vadd.f32 %v1533, %v1602
        %v1635 = vadd.f32 %v1534, %v1603
        %v1636 = vadd.f32 %v1535, %v1604
        %s1637 = scalar_lea.vmem [#allocation2], 48
        %v1638 = vld [vmem:[%s1637] sm:$0xff]
        %v1639 = vld [vmem:[%s1637 + $0x8] sm:$0xff]
        %v1640 = vld [vmem:[%s1637 + $0x18] sm:$0xff]
        %v1641 = vld [vmem:[%s1637 + $0x20] sm:$0xff]
        %v1642 = vld [vmem:[%s1637 + $0x30] sm:$0xff]
        %v1643 = vld [vmem:[%s1637 + $0x38] sm:$0xff]
        %v1644 = vld [vmem:[%s1637 + $0x48] sm:$0xff]
        %v1645 = vld [vmem:[%s1637 + $0x50] sm:$0xff]
        %v1646 = vld [vmem:[%s1637 + $0x60] sm:$0xff]
        %v1647 = vld [vmem:[%s1637 + $0x68] sm:$0xff]
        %v1648 = vld [vmem:[%s1637 + $0x78] sm:$0xff]
        %v1649 = vld [vmem:[%s1637 + $0x80] sm:$0xff]
        %v1650 = vld [vmem:[%s1637 + $0x90] sm:$0xff]
        %v1651 = vld [vmem:[%s1637 + $0x98] sm:$0xff]
        %v1652 = vld [vmem:[%s1637 + $0xa8] sm:$0xff]
        %v1653 = vld [vmem:[%s1637 + $0xb0] sm:$0xff]
        %v1654 = vld [vmem:[%s1637 + $0xc0] sm:$0xff]
        %v1655 = vld [vmem:[%s1637 + $0xc8] sm:$0xff]
        %v1656 = vld [vmem:[%s1637 + $0xd8] sm:$0xff]
        %v1657 = vld [vmem:[%s1637 + $0xe0] sm:$0xff]
        %v1658 = vld [vmem:[%s1637 + $0xf0] sm:$0xff]
        %v1659 = vld [vmem:[%s1637 + $0xf8] sm:$0xff]
        %v1660 = vld [vmem:[%s1637 + $0x108] sm:$0xff]
        %v1661 = vld [vmem:[%s1637 + $0x110] sm:$0xff]
        %v1662 = vld [vmem:[%s1637 + $0x120] sm:$0xff]
        %v1663 = vld [vmem:[%s1637 + $0x128] sm:$0xff]
        %v1664 = vld [vmem:[%s1637 + $0x138] sm:$0xff]
        %v1665 = vld [vmem:[%s1637 + $0x140] sm:$0xff]
        %v1666 = vld [vmem:[%s1637 + $0x150] sm:$0xff]
        %v1667 = vld [vmem:[%s1637 + $0x158] sm:$0xff]
        %v1668 = vld [vmem:[%s1637 + $0x168] sm:$0xff]
        %v1669 = vld [vmem:[%s1637 + $0x170] sm:$0xff]
        %v1670 = vld [vmem:[%s3 + $0x6] sm:$0x1]
        %v1671 = vlaneseq
        %v1672 = vshrl.u32 %v1671, 7
        %v1673 = vsub.s32 0, %v1672
        %v1674 = vrot.slane %v1670, %v1673
        %v1675 = vmul.f32 %v1638, %v1674
        %v1676 = vmul.f32 %v1639, %v1674
        %v1677 = vmul.f32 %v1640, %v1674
        %v1678 = vmul.f32 %v1641, %v1674
        %v1679 = vmul.f32 %v1642, %v1674
        %v1680 = vmul.f32 %v1643, %v1674
        %v1681 = vmul.f32 %v1644, %v1674
        %v1682 = vmul.f32 %v1645, %v1674
        %v1683 = vmul.f32 %v1646, %v1674
        %v1684 = vmul.f32 %v1647, %v1674
        %v1685 = vmul.f32 %v1648, %v1674
        %v1686 = vmul.f32 %v1649, %v1674
        %v1687 = vmul.f32 %v1650, %v1674
        %v1688 = vmul.f32 %v1651, %v1674
        %v1689 = vmul.f32 %v1652, %v1674
        %v1690 = vmul.f32 %v1653, %v1674
        %v1691 = vmul.f32 %v1654, %v1674
        %v1692 = vmul.f32 %v1655, %v1674
        %v1693 = vmul.f32 %v1656, %v1674
        %v1694 = vmul.f32 %v1657, %v1674
        %v1695 = vmul.f32 %v1658, %v1674
        %v1696 = vmul.f32 %v1659, %v1674
        %v1697 = vmul.f32 %v1660, %v1674
        %v1698 = vmul.f32 %v1661, %v1674
        %v1699 = vmul.f32 %v1662, %v1674
        %v1700 = vmul.f32 %v1663, %v1674
        %v1701 = vmul.f32 %v1664, %v1674
        %v1702 = vmul.f32 %v1665, %v1674
        %v1703 = vmul.f32 %v1666, %v1674
        %v1704 = vmul.f32 %v1667, %v1674
        %v1705 = vmul.f32 %v1668, %v1674
        %v1706 = vmul.f32 %v1669, %v1674
        %v1707 = vadd.f32 %v1605, %v1675
        %v1708 = vadd.f32 %v1606, %v1676
        %v1709 = vadd.f32 %v1607, %v1677
        %v1710 = vadd.f32 %v1608, %v1678
        %v1711 = vadd.f32 %v1609, %v1679
        %v1712 = vadd.f32 %v1610, %v1680
        %v1713 = vadd.f32 %v1611, %v1681
        %v1714 = vadd.f32 %v1612, %v1682
        %v1715 = vadd.f32 %v1613, %v1683
        %v1716 = vadd.f32 %v1614, %v1684
        %v1717 = vadd.f32 %v1615, %v1685
        %v1718 = vadd.f32 %v1616, %v1686
        %v1719 = vadd.f32 %v1617, %v1687
        %v1720 = vadd.f32 %v1618, %v1688
        %v1721 = vadd.f32 %v1619, %v1689
        %v1722 = vadd.f32 %v1620, %v1690
        %v1723 = vadd.f32 %v1621, %v1691
        %v1724 = vadd.f32 %v1622, %v1692
        %v1725 = vadd.f32 %v1623, %v1693
        %v1726 = vadd.f32 %v1624, %v1694
        %v1727 = vadd.f32 %v1625, %v1695
        %v1728 = vadd.f32 %v1626, %v1696
        %v1729 = vadd.f32 %v1627, %v1697
        %v1730 = vadd.f32 %v1628, %v1698
        %v1731 = vadd.f32 %v1629, %v1699
        %v1732 = vadd.f32 %v1630, %v1700
        %v1733 = vadd.f32 %v1631, %v1701
        %v1734 = vadd.f32 %v1632, %v1702
        %v1735 = vadd.f32 %v1633, %v1703
        %v1736 = vadd.f32 %v1634, %v1704
        %v1737 = vadd.f32 %v1635, %v1705
        %v1738 = vadd.f32 %v1636, %v1706
        %v1739 = vld [vmem:[%s1637 + $0x1] sm:$0xff]
        %v1740 = vld [vmem:[%s1637 + $0x9] sm:$0xff]
        %v1741 = vld [vmem:[%s1637 + $0x19] sm:$0xff]
        %v1742 = vld [vmem:[%s1637 + $0x21] sm:$0xff]
        %v1743 = vld [vmem:[%s1637 + $0x31] sm:$0xff]
        %v1744 = vld [vmem:[%s1637 + $0x39] sm:$0xff]
        %v1745 = vld [vmem:[%s1637 + $0x49] sm:$0xff]
        %v1746 = vld [vmem:[%s1637 + $0x51] sm:$0xff]
        %v1747 = vld [vmem:[%s1637 + $0x61] sm:$0xff]
        %v1748 = vld [vmem:[%s1637 + $0x69] sm:$0xff]
        %v1749 = vld [vmem:[%s1637 + $0x79] sm:$0xff]
        %v1750 = vld [vmem:[%s1637 + $0x81] sm:$0xff]
        %v1751 = vld [vmem:[%s1637 + $0x91] sm:$0xff]
        %v1752 = vld [vmem:[%s1637 + $0x99] sm:$0xff]
        %v1753 = vld [vmem:[%s1637 + $0xa9] sm:$0xff]
        %v1754 = vld [vmem:[%s1637 + $0xb1] sm:$0xff]
        %v1755 = vld [vmem:[%s1637 + $0xc1] sm:$0xff]
        %v1756 = vld [vmem:[%s1637 + $0xc9] sm:$0xff]
        %v1757 = vld [vmem:[%s1637 + $0xd9] sm:$0xff]
        %v1758 = vld [vmem:[%s1637 + $0xe1] sm:$0xff]
        %v1759 = vld [vmem:[%s1637 + $0xf1] sm:$0xff]
        %v1760 = vld [vmem:[%s1637 + $0xf9] sm:$0xff]
        %v1761 = vld [vmem:[%s1637 + $0x109] sm:$0xff]
        %v1762 = vld [vmem:[%s1637 + $0x111] sm:$0xff]
        %v1763 = vld [vmem:[%s1637 + $0x121] sm:$0xff]
        %v1764 = vld [vmem:[%s1637 + $0x129] sm:$0xff]
        %v1765 = vld [vmem:[%s1637 + $0x139] sm:$0xff]
        %v1766 = vld [vmem:[%s1637 + $0x141] sm:$0xff]
        %v1767 = vld [vmem:[%s1637 + $0x151] sm:$0xff]
        %v1768 = vld [vmem:[%s1637 + $0x159] sm:$0xff]
        %v1769 = vld [vmem:[%s1637 + $0x169] sm:$0xff]
        %v1770 = vld [vmem:[%s1637 + $0x171] sm:$0xff]
        %v1771 = vld [vmem:[%s3 + $0x7] sm:$0x1]
        %v1772 = vlaneseq
        %v1773 = vshrl.u32 %v1772, 7
        %v1774 = vsub.s32 0, %v1773
        %v1775 = vrot.slane %v1771, %v1774
        %v1776 = vmul.f32 %v1739, %v1775
        %v1777 = vmul.f32 %v1740, %v1775
        %v1778 = vmul.f32 %v1741, %v1775
        %v1779 = vmul.f32 %v1742, %v1775
        %v1780 = vmul.f32 %v1743, %v1775
        %v1781 = vmul.f32 %v1744, %v1775
        %v1782 = vmul.f32 %v1745, %v1775
        %v1783 = vmul.f32 %v1746, %v1775
        %v1784 = vmul.f32 %v1747, %v1775
        %v1785 = vmul.f32 %v1748, %v1775
        %v1786 = vmul.f32 %v1749, %v1775
        %v1787 = vmul.f32 %v1750, %v1775
        %v1788 = vmul.f32 %v1751, %v1775
        %v1789 = vmul.f32 %v1752, %v1775
        %v1790 = vmul.f32 %v1753, %v1775
        %v1791 = vmul.f32 %v1754, %v1775
        %v1792 = vmul.f32 %v1755, %v1775
        %v1793 = vmul.f32 %v1756, %v1775
        %v1794 = vmul.f32 %v1757, %v1775
        %v1795 = vmul.f32 %v1758, %v1775
        %v1796 = vmul.f32 %v1759, %v1775
        %v1797 = vmul.f32 %v1760, %v1775
        %v1798 = vmul.f32 %v1761, %v1775
        %v1799 = vmul.f32 %v1762, %v1775
        %v1800 = vmul.f32 %v1763, %v1775
        %v1801 = vmul.f32 %v1764, %v1775
        %v1802 = vmul.f32 %v1765, %v1775
        %v1803 = vmul.f32 %v1766, %v1775
        %v1804 = vmul.f32 %v1767, %v1775
        %v1805 = vmul.f32 %v1768, %v1775
        %v1806 = vmul.f32 %v1769, %v1775
        %v1807 = vmul.f32 %v1770, %v1775
        %v1808 = vadd.f32 %v1707, %v1776
        %v1809 = vadd.f32 %v1708, %v1777
        %v1810 = vadd.f32 %v1709, %v1778
        %v1811 = vadd.f32 %v1710, %v1779
        %v1812 = vadd.f32 %v1711, %v1780
        %v1813 = vadd.f32 %v1712, %v1781
        %v1814 = vadd.f32 %v1713, %v1782
        %v1815 = vadd.f32 %v1714, %v1783
        %v1816 = vadd.f32 %v1715, %v1784
        %v1817 = vadd.f32 %v1716, %v1785
        %v1818 = vadd.f32 %v1717, %v1786
        %v1819 = vadd.f32 %v1718, %v1787
        %v1820 = vadd.f32 %v1719, %v1788
        %v1821 = vadd.f32 %v1720, %v1789
        %v1822 = vadd.f32 %v1721, %v1790
        %v1823 = vadd.f32 %v1722, %v1791
        %v1824 = vadd.f32 %v1723, %v1792
        %v1825 = vadd.f32 %v1724, %v1793
        %v1826 = vadd.f32 %v1725, %v1794
        %v1827 = vadd.f32 %v1726, %v1795
        %v1828 = vadd.f32 %v1727, %v1796
        %v1829 = vadd.f32 %v1728, %v1797
        %v1830 = vadd.f32 %v1729, %v1798
        %v1831 = vadd.f32 %v1730, %v1799
        %v1832 = vadd.f32 %v1731, %v1800
        %v1833 = vadd.f32 %v1732, %v1801
        %v1834 = vadd.f32 %v1733, %v1802
        %v1835 = vadd.f32 %v1734, %v1803
        %v1836 = vadd.f32 %v1735, %v1804
        %v1837 = vadd.f32 %v1736, %v1805
        %v1838 = vadd.f32 %v1737, %v1806
        %v1839 = vadd.f32 %v1738, %v1807
        %v1840 = vld [vmem:[%s1637 + $0x2] sm:$0xff]
        %v1841 = vld [vmem:[%s1637 + $0xa] sm:$0xff]
        %v1842 = vld [vmem:[%s1637 + $0x1a] sm:$0xff]
        %v1843 = vld [vmem:[%s1637 + $0x22] sm:$0xff]
        %v1844 = vld [vmem:[%s1637 + $0x32] sm:$0xff]
        %v1845 = vld [vmem:[%s1637 + $0x3a] sm:$0xff]
        %v1846 = vld [vmem:[%s1637 + $0x4a] sm:$0xff]
        %v1847 = vld [vmem:[%s1637 + $0x52] sm:$0xff]
        %v1848 = vld [vmem:[%s1637 + $0x62] sm:$0xff]
        %v1849 = vld [vmem:[%s1637 + $0x6a] sm:$0xff]
        %v1850 = vld [vmem:[%s1637 + $0x7a] sm:$0xff]
        %v1851 = vld [vmem:[%s1637 + $0x82] sm:$0xff]
        %v1852 = vld [vmem:[%s1637 + $0x92] sm:$0xff]
        %v1853 = vld [vmem:[%s1637 + $0x9a] sm:$0xff]
        %v1854 = vld [vmem:[%s1637 + $0xaa] sm:$0xff]
        %v1855 = vld [vmem:[%s1637 + $0xb2] sm:$0xff]
        %v1856 = vld [vmem:[%s1637 + $0xc2] sm:$0xff]
        %v1857 = vld [vmem:[%s1637 + $0xca] sm:$0xff]
        %v1858 = vld [vmem:[%s1637 + $0xda] sm:$0xff]
        %v1859 = vld [vmem:[%s1637 + $0xe2] sm:$0xff]
        %v1860 = vld [vmem:[%s1637 + $0xf2] sm:$0xff]
        %v1861 = vld [vmem:[%s1637 + $0xfa] sm:$0xff]
        %v1862 = vld [vmem:[%s1637 + $0x10a] sm:$0xff]
        %v1863 = vld [vmem:[%s1637 + $0x112] sm:$0xff]
        %v1864 = vld [vmem:[%s1637 + $0x122] sm:$0xff]
        %v1865 = vld [vmem:[%s1637 + $0x12a] sm:$0xff]
        %v1866 = vld [vmem:[%s1637 + $0x13a] sm:$0xff]
        %v1867 = vld [vmem:[%s1637 + $0x142] sm:$0xff]
        %v1868 = vld [vmem:[%s1637 + $0x152] sm:$0xff]
        %v1869 = vld [vmem:[%s1637 + $0x15a] sm:$0xff]
        %v1870 = vld [vmem:[%s1637 + $0x16a] sm:$0xff]
        %v1871 = vld [vmem:[%s1637 + $0x172] sm:$0xff]
        %v1872 = vld [vmem:[%s3 + $0x8] sm:$0x1]
        %v1873 = vlaneseq
        %v1874 = vshrl.u32 %v1873, 7
        %v1875 = vsub.s32 0, %v1874
        %v1876 = vrot.slane %v1872, %v1875
        %v1877 = vmul.f32 %v1840, %v1876
        %v1878 = vmul.f32 %v1841, %v1876
        %v1879 = vmul.f32 %v1842, %v1876
        %v1880 = vmul.f32 %v1843, %v1876
        %v1881 = vmul.f32 %v1844, %v1876
        %v1882 = vmul.f32 %v1845, %v1876
        %v1883 = vmul.f32 %v1846, %v1876
        %v1884 = vmul.f32 %v1847, %v1876
        %v1885 = vmul.f32 %v1848, %v1876
        %v1886 = vmul.f32 %v1849, %v1876
        %v1887 = vmul.f32 %v1850, %v1876
        %v1888 = vmul.f32 %v1851, %v1876
        %v1889 = vmul.f32 %v1852, %v1876
        %v1890 = vmul.f32 %v1853, %v1876
        %v1891 = vmul.f32 %v1854, %v1876
        %v1892 = vmul.f32 %v1855, %v1876
        %v1893 = vmul.f32 %v1856, %v1876
        %v1894 = vmul.f32 %v1857, %v1876
        %v1895 = vmul.f32 %v1858, %v1876
        %v1896 = vmul.f32 %v1859, %v1876
        %v1897 = vmul.f32 %v1860, %v1876
        %v1898 = vmul.f32 %v1861, %v1876
        %v1899 = vmul.f32 %v1862, %v1876
        %v1900 = vmul.f32 %v1863, %v1876
        %v1901 = vmul.f32 %v1864, %v1876
        %v1902 = vmul.f32 %v1865, %v1876
        %v1903 = vmul.f32 %v1866, %v1876
        %v1904 = vmul.f32 %v1867, %v1876
        %v1905 = vmul.f32 %v1868, %v1876
        %v1906 = vmul.f32 %v1869, %v1876
        %v1907 = vmul.f32 %v1870, %v1876
        %v1908 = vmul.f32 %v1871, %v1876
        %v1909 = vadd.f32 %v1808, %v1877
        %v1910 = vadd.f32 %v1809, %v1878
        %v1911 = vadd.f32 %v1810, %v1879
        %v1912 = vadd.f32 %v1811, %v1880
        %v1913 = vadd.f32 %v1812, %v1881
        %v1914 = vadd.f32 %v1813, %v1882
        %v1915 = vadd.f32 %v1814, %v1883
        %v1916 = vadd.f32 %v1815, %v1884
        %v1917 = vadd.f32 %v1816, %v1885
        %v1918 = vadd.f32 %v1817, %v1886
        %v1919 = vadd.f32 %v1818, %v1887
        %v1920 = vadd.f32 %v1819, %v1888
        %v1921 = vadd.f32 %v1820, %v1889
        %v1922 = vadd.f32 %v1821, %v1890
        %v1923 = vadd.f32 %v1822, %v1891
        %v1924 = vadd.f32 %v1823, %v1892
        %v1925 = vadd.f32 %v1824, %v1893
        %v1926 = vadd.f32 %v1825, %v1894
        %v1927 = vadd.f32 %v1826, %v1895
        %v1928 = vadd.f32 %v1827, %v1896
        %v1929 = vadd.f32 %v1828, %v1897
        %v1930 = vadd.f32 %v1829, %v1898
        %v1931 = vadd.f32 %v1830, %v1899
        %v1932 = vadd.f32 %v1831, %v1900
        %v1933 = vadd.f32 %v1832, %v1901
        %v1934 = vadd.f32 %v1833, %v1902
        %v1935 = vadd.f32 %v1834, %v1903
        %v1936 = vadd.f32 %v1835, %v1904
        %v1937 = vadd.f32 %v1836, %v1905
        %v1938 = vadd.f32 %v1837, %v1906
        %v1939 = vadd.f32 %v1838, %v1907
        %v1940 = vadd.f32 %v1839, %v1908
        %v1941 = vld [vmem:[%s4] sm:$0x1]
        %v1943 = vlaneseq
        %v1944 = vshrl.u32 %v1943, 7
        %v1945 = vsub.s32 0, %v1944
        %v1946 = vrot.slane %v1941, %v1945
        %v1948 = vadd.f32 %v1909, %v1946
        %v1949 = vadd.f32 %v1910, %v1946
        %v1950 = vadd.f32 %v1911, %v1946
        %v1951 = vadd.f32 %v1912, %v1946
        %v1952 = vadd.f32 %v1913, %v1946
        %v1953 = vadd.f32 %v1914, %v1946
        %v1954 = vadd.f32 %v1915, %v1946
        %v1955 = vadd.f32 %v1916, %v1946
        %v1956 = vadd.f32 %v1917, %v1946
        %v1957 = vadd.f32 %v1918, %v1946
        %v1958 = vadd.f32 %v1919, %v1946
        %v1959 = vadd.f32 %v1920, %v1946
        %v1960 = vadd.f32 %v1921, %v1946
        %v1961 = vadd.f32 %v1922, %v1946
        %v1962 = vadd.f32 %v1923, %v1946
        %v1963 = vadd.f32 %v1924, %v1946
        %v1964 = vadd.f32 %v1925, %v1946
        %v1965 = vadd.f32 %v1926, %v1946
        %v1966 = vadd.f32 %v1927, %v1946
        %v1967 = vadd.f32 %v1928, %v1946
        %v1968 = vadd.f32 %v1929, %v1946
        %v1969 = vadd.f32 %v1930, %v1946
        %v1970 = vadd.f32 %v1931, %v1946
        %v1971 = vadd.f32 %v1932, %v1946
        %v1972 = vadd.f32 %v1933, %v1946
        %v1973 = vadd.f32 %v1934, %v1946
        %v1974 = vadd.f32 %v1935, %v1946
        %v1975 = vadd.f32 %v1936, %v1946
        %v1976 = vadd.f32 %v1937, %v1946
        %v1977 = vadd.f32 %v1938, %v1946
        %v1978 = vadd.f32 %v1939, %v1946
        %v1979 = vadd.f32 %v1940, %v1946
        %v1980 = vadd.f32 %v1948, %v1949
        %v1981 = vadd.f32 %v1980, %v1950
        %v1982 = vadd.f32 %v1981, %v1951
        %v1983 = vadd.f32 %v1982, %v1952
        %v1984 = vadd.f32 %v1983, %v1953
        %v1985 = vadd.f32 %v1984, %v1954
        %v1986 = vadd.f32 %v1985, %v1955
        %v1987 = vadd.f32 %v1986, %v1956
        %v1988 = vadd.f32 %v1987, %v1957
        %v1989 = vadd.f32 %v1988, %v1958
        %v1990 = vadd.f32 %v1989, %v1959
        %v1991 = vadd.f32 %v1990, %v1960
        %v1992 = vadd.f32 %v1991, %v1961
        %v1993 = vadd.f32 %v1992, %v1962
        %v1994 = vadd.f32 %v1993, %v1963
        %v1995 = vadd.f32 %v1994, %v1964
        %v1996 = vadd.f32 %v1995, %v1965
        %v1997 = vadd.f32 %v1996, %v1966
        %v1998 = vadd.f32 %v1997, %v1967
        %v1999 = vadd.f32 %v1998, %v1968
        %v2000 = vadd.f32 %v1999, %v1969
        %v2001 = vadd.f32 %v2000, %v1970
        %v2002 = vadd.f32 %v2001, %v1971
        %v2003 = vadd.f32 %v2002, %v1972
        %v2004 = vadd.f32 %v2003, %v1973
        %v2005 = vadd.f32 %v2004, %v1974
        %v2006 = vadd.f32 %v2005, %v1975
        %v2007 = vadd.f32 %v2006, %v1976
        %v2008 = vadd.f32 %v2007, %v1977
        %v2009 = vadd.f32 %v2008, %v1978
        %v2010 = vadd.f32 %v2009, %v1979
        %v2011 = vrot.slane %v2010, 4
        %v2012 = vadd.f32 %v2010, %v2011
        %v2013 = vrot.slane %v2012, 2
        %v2014 = vadd.f32 %v2012, %v2013
        %v2015 = vrot.slane %v2014, 1
        %v2016 = vadd.f32 %v2014, %v2015
        %v2017 = vrcp.pop 256.0
        %v2018 = vmul.f32 %v2016, %v2017
        %v2019 = vld [vmem:[%s5] sm:$0xff]
        %v2020 = vld [vmem:[%s5 + $0x8] sm:$0xff]
        %v2021 = vld [vmem:[%s5 + $0x10] sm:$0xff]
        %v2022 = vld [vmem:[%s5 + $0x18] sm:$0xff]
        %v2023 = vld [vmem:[%s5 + $0x20] sm:$0xff]
        %v2024 = vld [vmem:[%s5 + $0x28] sm:$0xff]
        %v2025 = vld [vmem:[%s5 + $0x30] sm:$0xff]
        %v2026 = vld [vmem:[%s5 + $0x38] sm:$0xff]
        %v2027 = vld [vmem:[%s5 + $0x40] sm:$0xff]
        %v2028 = vld [vmem:[%s5 + $0x48] sm:$0xff]
        %v2029 = vld [vmem:[%s5 + $0x50] sm:$0xff]
        %v2030 = vld [vmem:[%s5 + $0x58] sm:$0xff]
        %v2031 = vld [vmem:[%s5 + $0x60] sm:$0xff]
        %v2032 = vld [vmem:[%s5 + $0x68] sm:$0xff]
        %v2033 = vld [vmem:[%s5 + $0x70] sm:$0xff]
        %v2034 = vld [vmem:[%s5 + $0x78] sm:$0xff]
        %v2035 = vld [vmem:[%s6] sm:$0x1]
        %2036 = vmatprep.subr.mxu0 0.0
        %2037 = vmatpush1.msra.mxu0 %v2019
        %2038 = vmatprep.subr.mxu0 0.0
        %2039 = vmatpush1.msra.mxu0 %v2020
        %2040 = vmatprep.subr.mxu0 0.0
        %2041 = vmatpush1.msra.mxu0 %v2021
        %2042 = vmatprep.subr.mxu0 0.0
        %2043 = vmatpush1.msra.mxu0 %v2022
        %2044 = vmatprep.subr.mxu0 0.0
        %2045 = vmatpush1.msra.mxu0 %v2023
        %2046 = vmatprep.subr.mxu0 0.0
        %2047 = vmatpush1.msra.mxu0 %v2024
        %2048 = vmatprep.subr.mxu0 0.0
        %2049 = vmatpush1.msra.mxu0 %v2025
        %2050 = vmatprep.subr.mxu0 0.0
        %2051 = vmatpush1.msra.mxu0 %v2026
        %2052 = vmatprep.subr.mxu0 0.0
        %2053 = vmatpush1.msra.mxu0 %v2027
        %2054 = vmatprep.subr.mxu0 0.0
        %2055 = vmatpush1.msra.mxu0 %v2028
        %2056 = vmatprep.subr.mxu0 0.0
        %2057 = vmatpush1.msra.mxu0 %v2029
        %2058 = vmatprep.subr.mxu0 0.0
        %2059 = vmatpush1.msra.mxu0 %v2030
        %2060 = vmatprep.subr.mxu0 0.0
        %2061 = vmatpush1.msra.mxu0 %v2031
        %2062 = vmatprep.subr.mxu0 0.0
        %2063 = vmatpush1.msra.mxu0 %v2032
        %2064 = vmatprep.subr.mxu0 0.0
        %2065 = vmatpush1.msra.mxu0 %v2033
        %2066 = vmatprep.subr.mxu0 0.0
        %2067 = vmatpush1.msra.mxu0 %v2034
        %2068 = vmatprep.subr.mxu0 0.0
        %2069 = vmatpush1.msra.mxu0 0.0
        %2070 = vmatprep.subr.mxu0 0.0
        %2071 = vmatpush1.msra.mxu0 0.0
        %2072 = vmatprep.subr.mxu0 0.0
        %2073 = vmatpush1.msra.mxu0 0.0
        %2074 = vmatprep.subr.mxu0 0.0
        %2075 = vmatpush1.msra.mxu0 0.0
        %2076 = vmatprep.subr.mxu0 0.0
        %2077 = vmatpush1.msra.mxu0 0.0
        %2078 = vmatprep.subr.mxu0 0.0
        %2079 = vmatpush1.msra.mxu0 0.0
        %2080 = vmatprep.subr.mxu0 0.0
        %2081 = vmatpush1.msra.mxu0 0.0
        %2082 = vmatprep.subr.mxu0 0.0
        %2083 = vmatpush1.msra.mxu0 0.0
        %2084 = vmatprep.subr.mxu0 0.0
        %2085 = vmatpush1.msra.mxu0 0.0
        %2086 = vmatprep.subr.mxu0 0.0
        %2087 = vmatpush1.msra.mxu0 0.0
        %2088 = vmatprep.subr.mxu0 0.0
        %2089 = vmatpush1.msra.mxu0 0.0
        %2090 = vmatprep.subr.mxu0 0.0
        %2091 = vmatpush1.msra.mxu0 0.0
        %2092 = vmatprep.subr.mxu0 0.0
        %2093 = vmatpush1.msra.mxu0 0.0
        %2094 = vmatprep.subr.mxu0 0.0
        %2095 = vmatpush1.msra.mxu0 0.0
        %2096 = vmatprep.subr.mxu0 0.0
        %2097 = vmatpush1.msra.mxu0 0.0
        %2098 = vmatprep.subr.mxu0 0.0
        %2099 = vmatpush1.msra.mxu0 0.0
        %2100 = vmatprep.mubr.f32.mxu0 0.0
        %2101 = vmatmul.mubr.f32.gmra.mrb[0].mxu0 %v2018
        %v2102 = vpop.f32.mrb[0].mxu0
        %v2103 = vadd.f32 %v2035, %v2102
        %v2104 = vpop.f32.mrb[0].mxu0
        %2105 = vdwg.mxu0
        %v2106 = vmax.f32 %v2103, 0.0
        %v2107 = vld [vmem:[%s7] sm:$0xff]
        %v2108 = vld [vmem:[%s7 + $0x8] sm:$0xff]
        %v2109 = vld [vmem:[%s7 + $0x10] sm:$0xff]
        %v2110 = vld [vmem:[%s7 + $0x18] sm:$0xff]
        %v2111 = vld [vmem:[%s8] sm:$0x1]
        %vm2112 = vcmask 261120
        %v2114 = vsel %vm2112, %v2106, 0
        %2116 = vmatprep.subr.mxu0 0.0
        %2117 = vmatpush1.msra.mxu0 %v2107
        %2118 = vmatprep.subr.mxu0 0.0
        %2119 = vmatpush1.msra.mxu0 %v2108
        %2120 = vmatprep.subr.mxu0 0.0
        %2121 = vmatpush1.msra.mxu0 %v2109
        %2122 = vmatprep.subr.mxu0 0.0
        %2123 = vmatpush1.msra.mxu0 %v2110
        %2124 = vmatprep.subr.mxu0 0.0
        %2125 = vmatpush1.msra.mxu0 0.0
        %2126 = vmatprep.subr.mxu0 0.0
        %2127 = vmatpush1.msra.mxu0 0.0
        %2128 = vmatprep.subr.mxu0 0.0
        %2129 = vmatpush1.msra.mxu0 0.0
        %2130 = vmatprep.subr.mxu0 0.0
        %2131 = vmatpush1.msra.mxu0 0.0
        %2132 = vmatprep.subr.mxu0 0.0
        %2133 = vmatpush1.msra.mxu0 0.0
        %2134 = vmatprep.subr.mxu0 0.0
        %2135 = vmatpush1.msra.mxu0 0.0
        %2136 = vmatprep.subr.mxu0 0.0
        %2137 = vmatpush1.msra.mxu0 0.0
        %2138 = vmatprep.subr.mxu0 0.0
        %2139 = vmatpush1.msra.mxu0 0.0
        %2140 = vmatprep.subr.mxu0 0.0
        %2141 = vmatpush1.msra.mxu0 0.0
        %2142 = vmatprep.subr.mxu0 0.0
        %2143 = vmatpush1.msra.mxu0 0.0
        %2144 = vmatprep.subr.mxu0 0.0
        %2145 = vmatpush1.msra.mxu0 0.0
        %2146 = vmatprep.subr.mxu0 0.0
        %2147 = vmatpush1.msra.mxu0 0.0
        %2148 = vmatprep.subr.mxu0 0.0
        %2149 = vmatpush1.msra.mxu0 0.0
        %2150 = vmatprep.subr.mxu0 0.0
        %2151 = vmatpush1.msra.mxu0 0.0
        %2152 = vmatprep.subr.mxu0 0.0
        %2153 = vmatpush1.msra.mxu0 0.0
        %2154 = vmatprep.subr.mxu0 0.0
        %2155 = vmatpush1.msra.mxu0 0.0
        %2156 = vmatprep.subr.mxu0 0.0
        %2157 = vmatpush1.msra.mxu0 0.0
        %2158 = vmatprep.subr.mxu0 0.0
        %2159 = vmatpush1.msra.mxu0 0.0
        %2160 = vmatprep.subr.mxu0 0.0
        %2161 = vmatpush1.msra.mxu0 0.0
        %2162 = vmatprep.subr.mxu0 0.0
        %2163 = vmatpush1.msra.mxu0 0.0
        %2164 = vmatprep.subr.mxu0 0.0
        %2165 = vmatpush1.msra.mxu0 0.0
        %2166 = vmatprep.subr.mxu0 0.0
        %2167 = vmatpush1.msra.mxu0 0.0
        %2168 = vmatprep.subr.mxu0 0.0
        %2169 = vmatpush1.msra.mxu0 0.0
        %2170 = vmatprep.subr.mxu0 0.0
        %2171 = vmatpush1.msra.mxu0 0.0
        %2172 = vmatprep.subr.mxu0 0.0
        %2173 = vmatpush1.msra.mxu0 0.0
        %2174 = vmatprep.subr.mxu0 0.0
        %2175 = vmatpush1.msra.mxu0 0.0
        %2176 = vmatprep.subr.mxu0 0.0
        %2177 = vmatpush1.msra.mxu0 0.0
        %2178 = vmatprep.subr.mxu0 0.0
        %2179 = vmatpush1.msra.mxu0 0.0
        %2180 = vmatprep.mubr.f32.mxu0 0.0
        %2181 = vmatmul.mubr.f32.gmra.mrb[0].mxu0 %v2114
        %v2182 = vpop.f32.mrb[0].mxu0
        %v2183 = vadd.f32 %v2111, %v2182
        %v2184 = vpop.f32.mrb[0].mxu0
        %2185 = vdwg.mxu0
        %v2186 = vadd.f32 %v2183, 3.0
        %v2187 = vmax.f32 %v2186, 0.0
        %v2188 = vmin.f32 %v2187, 6.0
        %v2189 = vmul.f32 %v2188, 0.16666667
        %v2190 = vlaneseq
        %v2191 = vshrl.u32 %v2190, 7
        %v2192 = vsub.s32 0, %v2191
        %v2193 = vrot.slane %v2189, %v2192
        %v2194 = vmul.f32 %v1948, %v2193
        %v2195 = vmul.f32 %v1949, %v2193
        %v2196 = vmul.f32 %v1950, %v2193
        %v2197 = vmul.f32 %v1951, %v2193
        %v2198 = vmul.f32 %v1952, %v2193
        %v2199 = vmul.f32 %v1953, %v2193
        %v2200 = vmul.f32 %v1954, %v2193
        %v2201 = vmul.f32 %v1955, %v2193
        %v2202 = vmul.f32 %v1956, %v2193
        %v2203 = vmul.f32 %v1957, %v2193
        %v2204 = vmul.f32 %v1958, %v2193
        %v2205 = vmul.f32 %v1959, %v2193
        %v2206 = vmul.f32 %v1960, %v2193
        %v2207 = vmul.f32 %v1961, %v2193
        %v2208 = vmul.f32 %v1962, %v2193
        %v2209 = vmul.f32 %v1963, %v2193
        %v2210 = vmul.f32 %v1964, %v2193
        %v2211 = vmul.f32 %v1965, %v2193
        %v2212 = vmul.f32 %v1966, %v2193
        %v2213 = vmul.f32 %v1967, %v2193
        %v2214 = vmul.f32 %v1968, %v2193
        %v2215 = vmul.f32 %v1969, %v2193
        %v2216 = vmul.f32 %v1970, %v2193
        %v2217 = vmul.f32 %v1971, %v2193
        %v2218 = vmul.f32 %v1972, %v2193
        %v2219 = vmul.f32 %v1973, %v2193
        %v2220 = vmul.f32 %v1974, %v2193
        %v2221 = vmul.f32 %v1975, %v2193
        %v2222 = vmul.f32 %v1976, %v2193
        %v2223 = vmul.f32 %v1977, %v2193
        %v2224 = vmul.f32 %v1978, %v2193
        %v2225 = vmul.f32 %v1979, %v2193
        %v2226 = vld [vmem:[%s9] sm:$0xff]
        %v2227 = vld [vmem:[%s9 + $0x8] sm:$0xff]
        %v2228 = vld [vmem:[%s10] sm:$0xff]
        %v2229 = vld [vmem:[%s10 + $0x8] sm:$0xff]
        %2231 = vset.pattern.permute.xlu0 0
        %2232 = vperm.xlu0 %2231, %v2228
        %v2233 = vpop.permute.xlu0 %2232
        %2236 = vset.pattern.permute.xlu0 0
        %2237 = vperm.xlu0 %2236, %v2229
        %v2238 = vpop.permute.xlu0 %2237
        %2240 = vmatprep.subr.mxu0 0.0
        %2241 = vmatpush1.xpose.msra.mxu0 %v2194
        %2242 = vmatprep.subr.mxu0 0.0
        %2243 = vmatpush1.xpose.msra.mxu0 %v2195
        %2244 = vmatprep.subr.mxu0 0.0
        %2245 = vmatpush1.xpose.msra.mxu0 %v2196
        %2246 = vmatprep.subr.mxu0 0.0
        %2247 = vmatpush1.xpose.msra.mxu0 %v2197
        %2248 = vmatprep.subr.mxu0 0.0
        %2249 = vmatpush1.xpose.msra.mxu0 %v2198
        %2250 = vmatprep.subr.mxu0 0.0
        %2251 = vmatpush1.xpose.msra.mxu0 %v2199
        %2252 = vmatprep.subr.mxu0 0.0
        %2253 = vmatpush1.xpose.msra.mxu0 %v2200
        %2254 = vmatprep.subr.mxu0 0.0
        %2255 = vmatpush1.xpose.msra.mxu0 %v2201
        %2256 = vmatprep.subr.mxu0 0.0
        %2257 = vmatpush1.xpose.msra.mxu0 %v2202
        %2258 = vmatprep.subr.mxu0 0.0
        %2259 = vmatpush1.xpose.msra.mxu0 %v2203
        %2260 = vmatprep.subr.mxu0 0.0
        %2261 = vmatpush1.xpose.msra.mxu0 %v2204
        %2262 = vmatprep.subr.mxu0 0.0
        %2263 = vmatpush1.xpose.msra.mxu0 %v2205
        %2264 = vmatprep.subr.mxu0 0.0
        %2265 = vmatpush1.xpose.msra.mxu0 %v2206
        %2266 = vmatprep.subr.mxu0 0.0
        %2267 = vmatpush1.xpose.msra.mxu0 %v2207
        %2268 = vmatprep.subr.mxu0 0.0
        %2269 = vmatpush1.xpose.msra.mxu0 %v2208
        %2270 = vmatprep.subr.mxu0 0.0
        %2271 = vmatpush1.xpose.msra.mxu0 %v2209
        %2272 = vmatprep.subr.mxu0 0.0
        %2273 = vmatpush1.xpose.msra.mxu0 %v2210
        %2274 = vmatprep.subr.mxu0 0.0
        %2275 = vmatpush1.xpose.msra.mxu0 %v2211
        %2276 = vmatprep.subr.mxu0 0.0
        %2277 = vmatpush1.xpose.msra.mxu0 %v2212
        %2278 = vmatprep.subr.mxu0 0.0
        %2279 = vmatpush1.xpose.msra.mxu0 %v2213
        %2280 = vmatprep.subr.mxu0 0.0
        %2281 = vmatpush1.xpose.msra.mxu0 %v2214
        %2282 = vmatprep.subr.mxu0 0.0
        %2283 = vmatpush1.xpose.msra.mxu0 %v2215
        %2284 = vmatprep.subr.mxu0 0.0
        %2285 = vmatpush1.xpose.msra.mxu0 %v2216
        %2286 = vmatprep.subr.mxu0 0.0
        %2287 = vmatpush1.xpose.msra.mxu0 %v2217
        %2288 = vmatprep.subr.mxu0 0.0
        %2289 = vmatpush1.xpose.msra.mxu0 %v2218
        %2290 = vmatprep.subr.mxu0 0.0
        %2291 = vmatpush1.xpose.msra.mxu0 %v2219
        %2292 = vmatprep.subr.mxu0 0.0
        %2293 = vmatpush1.xpose.msra.mxu0 %v2220
        %2294 = vmatprep.subr.mxu0 0.0
        %2295 = vmatpush1.xpose.msra.mxu0 %v2221
        %2296 = vmatprep.subr.mxu0 0.0
        %2297 = vmatpush1.xpose.msra.mxu0 %v2222
        %2298 = vmatprep.subr.mxu0 0.0
        %2299 = vmatpush1.xpose.msra.mxu0 %v2223
        %2300 = vmatprep.subr.mxu0 0.0
        %2301 = vmatpush1.xpose.msra.mxu0 %v2224
        %2302 = vmatprep.subr.mxu0 0.0
        %2303 = vmatpush1.xpose.msra.mxu0 %v2225
        %2304 = vmatprep.mubr.f32.mxu0 0.0
        %2305 = vmatmul.mubr.f32.gmra.mrb[0].mxu0 %v2226
        %v2306 = vpop.f32.mrb[0].mxu0
        %v2307 = vadd.f32 %v2233, %v2306
        %v2308 = vpop.f32.mrb[0].mxu0
        %v2309 = vadd.f32 %v2233, %v2308
        %2310 = vmatprep.mubr.f32.mxu0 0.0
        %2311 = vmatmul.mubr.f32.gmra.mrb[0].mxu0 %v2227
        %v2312 = vpop.f32.mrb[0].mxu0
        %v2313 = vadd.f32 %v2238, %v2312
        %v2314 = vpop.f32.mrb[0].mxu0
        %v2315 = vadd.f32 %v2238, %v2314
        %2316 = vdwg.mxu0
        %v2317 = vadd.f32 %v2307, 3.0
        %v2318 = vadd.f32 %v2309, 3.0
        %v2319 = vadd.f32 %v2313, 3.0
        %v2320 = vadd.f32 %v2315, 3.0
        %v2321 = vmax.f32 %v2317, 0.0
        %v2322 = vmax.f32 %v2318, 0.0
        %v2323 = vmax.f32 %v2319, 0.0
        %v2324 = vmax.f32 %v2320, 0.0
        %v2325 = vmin.f32 %v2321, 6.0
        %v2326 = vmin.f32 %v2322, 6.0
        %v2327 = vmin.f32 %v2323, 6.0
        %v2328 = vmin.f32 %v2324, 6.0
        %v2329 = vmul.f32 %v2325, 0.16666667
        %v2330 = vmul.f32 %v2326, 0.16666667
        %v2331 = vmul.f32 %v2327, 0.16666667
        %v2332 = vmul.f32 %v2328, 0.16666667
        %v2333 = vmul.f32 %v2307, %v2329
        %v2334 = vmul.f32 %v2309, %v2330
        %v2335 = vmul.f32 %v2313, %v2331
        %v2336 = vmul.f32 %v2315, %v2332
        %v2337 = vadd.f32 %v2333, %v439
        %v2338 = vadd.f32 %v2334, %v440
        %v2339 = vadd.f32 %v2335, %v441
        %v2340 = vadd.f32 %v2336, %v442
        %2341 = vst [vmem:[%s379] sm:$0xff] %v2337
        %2342 = vst [vmem:[%s379 + $0x8] sm:$0xff] %v2338
        %2343 = vst [vmem:[%s379 + $0x10] sm:$0xff] %v2339
        %2344 = vst [vmem:[%s379 + $0x18] sm:$0xff] %v2340
        %s2345 = sand.u32 %s269, 1
        %s2346 = scalar_lea.sflag [#allocation4], %s2345
        %s2347 = sand.u32 %s269, 1
        %s2348 = smul.addr %s2347, 32
        %s2349 = scalar_lea.vmem [#allocation3], %s2348
        // Predicated region
        $region65: #{tpu_custom_call.1} parent=63 // pred_check
          %p2350 = pneg %p279
        $region66: #{tpu_custom_call.1} parent=63 // pred_check_branch
          %2352 = sbr.rel (%p2350) target = $region68
        $region67: #{tpu_custom_call.1} parent=63 // pred_region
          %s2354 = ssub.s32 512, 512
          %2355 = vsyncadd %s2346, %s2354
          %s2356 = smul.addr %s25, 4
          %s2357 = smul.addr %s2356, 128
          %s2358 = scalar_lea.hbm %s11, %s2357
          %s2359 = sshll.u32 %s2349, 4
          %s2360 = int_to_ptr.vmem [resolvable:$true] %s2359
          %2365 = dma.vmem_to_hbm [thread:$0]  %s2360, 512, %s2358, %s2346, 256, 256, 16
        $region68: #{tpu_custom_call.1} parent=63 // pred_fallthru
          _
      $region64: #{tpu_custom_call.1} parent=5 // pred_fallthru
        _
      %p2366 = scmp.le.s32.totalorder 2, %s20
      // Predicated region
      $region69: #{tpu_custom_call.1} parent=5 // pred_check
        %p2367 = pneg %p2366
      $region70: #{tpu_custom_call.1} parent=5 // pred_check_branch
        %2369 = sbr.rel (%p2367) target = $region72
      $region71: #{tpu_custom_call.1} parent=5 // pred_region
        %s2370 = ssub.s32 %s20, 2
        // Predicated region
        $region73: #{tpu_custom_call.1} parent=71 // pred_check
          %p2371 = pneg %p285
        $region74: #{tpu_custom_call.1} parent=71 // pred_check_branch
          %2373 = sbr.rel (%p2371) target = $region76
        $region75: #{tpu_custom_call.1} parent=71 // pred_region
          %s2374 = sand.u32 %s270, 1
          %s2375 = scalar_lea.sflag [#allocation4], %s2374
          %s2376 = sand.u32 %s270, 1
          %s2377 = smul.addr %s2376, 32
          %s2378 = scalar_lea.vmem [#allocation3], %s2377
          %2379 = dma.done %s2375, 512
        $region76: #{tpu_custom_call.1} parent=71 // pred_fallthru
          _
      $region72: #{tpu_custom_call.1} parent=5 // pred_fallthru
        _
    $region6: #{tpu_custom_call.1} parent=1 // loop_footer
      %s24 = sadd.s32 1, %s20
    $region7: #{tpu_custom_call.1} parent=1 // loop_footer_branch
      %19 = sbr.rel target = $region3
    $region8: #{tpu_custom_call.1} parent=1 // loop_exit
      _
    %2380 = vsyncpa [#allocation4], 1
    %s2381 = scalar_lea.sflag [#allocation4], 1
    %2382 = vsyncpa %s2381, 1

</llo_original>
